<compile_context>
chip_gen: v5e
topology: v5e:2x2
jax: 0.10.0
libtpu: 0.0.40
codegen_flags: <defaults>
</compile_context>

<pallas_src>
import math

import jax
import jax.numpy as jnp
from jax.experimental import pallas as pl
from jax.experimental.pallas import tpu as pltpu

BN_EPS = 1e-5


# ----------------------------------------------------------------------------
# Small helpers
# ----------------------------------------------------------------------------
def _vmem_limit_bytes(needed_bytes):
    """VMEM limit: at least 2x the estimated working set (>=32 MiB), capped at 3/4 of
    the physical per-core VMEM of the current generation (64 MiB fallback ~ v7x)."""
    cap = 64 * 1024 * 1024
    try:
        cap = int(pltpu.get_tpu_info().vmem_capacity_bytes)
    except Exception:
        pass
    budget = (cap * 3) // 4
    return int(min(budget, max(2 * int(needed_bytes), 32 * 1024 * 1024)))


def _pick_tile(total, target, align):
    """Largest divisor of `total` that is a multiple of `align` and <= target,
    falling back to `total` (single full tile) if none exists."""
    if total <= target:
        return total
    t = (target // align) * align
    while t >= align:
        if total % t == 0:
            return t
        t -= align
    return total


def _rep_spec(shape):
    """Full-array block, resident across the grid (constant block index)."""
    rank = len(shape)
    return pl.BlockSpec(shape, lambda j, _r=rank: (0,) * _r)


# ----------------------------------------------------------------------------
# Kernel 1: fused dual conv branch (bn0 -> conv1d -> bn1 -> relu) + deep FC
#           + bn2 + relu, tiled over the FC output (M) dimension.
# ----------------------------------------------------------------------------
def _branches_fc_kernel(x_ref, w_ref, b_ref, g0_ref, be0_ref, g1_ref, be1_ref,
                        wfc_ref, bfc_ref, g2_ref, b2_ref, h_ref, zflat_ref):
    # x: (2, B, Cin, E) f32          w: (2, Cin, K, C, 1) f32
    # b/g1/be1: (2, C, 1) f32        g0/be0: (2, Cin, 1) f32
    # wfc block: (2*C*E, tile_m) bf16    bfc/g2/b2 block: (1, tile_m) f32
    # h out block: (B, tile_m) bf16      zflat scratch: (B, 2*C*E) f32
    NBR, B, Cin, E = x_ref.shape
    _, _, K, C, _ = w_ref.shape
    pad = K // 2

    lane = jax.lax.broadcasted_iota(jnp.int32, (B, Cin, E), 2)

    def shifted(arr, s):
        # out[..., e] = arr[..., e - s], zero where (e - s) falls outside [0, E).
        if s == 0:
            return arr
        r = pltpu.roll(arr, s % E, axis=2)          # XLU rotation (jnp.roll semantics)
        if s > 0:
            return jnp.where(lane < s, 0.0, r)
        return jnp.where(lane >= E + s, 0.0, r)

    # The conv/BN front-end is cheap; it is recomputed per M tile so every grid step
    # is fully independent (safe under "parallel" / megacore sharding on v7x).
    for br in range(NBR):
        x = x_ref[br].astype(jnp.float32)           # (B, Cin, E)

        # BatchNorm1d(Cin), training mode: statistics over (batch, length).
        m0 = jnp.mean(jnp.mean(x, axis=2, keepdims=True), axis=0, keepdims=True)
        v0 = jnp.mean(jnp.mean((x - m0) ** 2, axis=2, keepdims=True),
                      axis=0, keepdims=True)
        y = (x - m0) * jax.lax.rsqrt(v0 + BN_EPS) * g0_ref[br][None] + be0_ref[br][None]

        # Conv1d(Cin -> C, kernel K, 'same'): taps via roll + edge mask (no padded
        # scratch buffer), accumulated as broadcast multiply-adds on the VPU.
        taps = [shifted(y, pad - k) for k in range(K)]
        acc = jnp.zeros((B, C, E), jnp.float32)
        for i in range(Cin):
            for k in range(K):
                acc = acc + taps[k][:, i:i + 1, :] * w_ref[br, i, k][None]  # (B,1,E)*(1,C,1)
        acc = acc + b_ref[br][None]

        # BatchNorm1d(C), training mode, then ReLU.
        m1 = jnp.mean(jnp.mean(acc, axis=2, keepdims=True), axis=0, keepdims=True)
        v1 = jnp.mean(jnp.mean((acc - m1) ** 2, axis=2, keepdims=True),
                      axis=0, keepdims=True)
        z = (acc - m1) * jax.lax.rsqrt(v1 + BN_EPS) * g1_ref[br][None] + be1_ref[br][None]
        z = jnp.maximum(z, 0.0)

        # Lay the branch out flat in (branch, channel, position) order so the FC below
        # is a single deep MXU contraction over 2*C*E instead of 2*C shallow dots.
        for c in range(C):
            col0 = (br * C + c) * E
            zflat_ref[:, col0:col0 + E] = z[:, c, :]

    # FC: one deep (2*C*E) contraction, f32 accumulate.  The weight tile arrives in
    # bf16 (half the HBM read) and is upcast so the matmul itself runs in f32.
    hacc = jnp.dot(zflat_ref[...], wfc_ref[...].astype(jnp.float32),
                   preferred_element_type=jnp.float32) + bfc_ref[...]

    if B > 1:  # static: matches `if batch_size > 1: x = self.bn2(x)`.
               # bn2 stats are per-feature over the batch -> exact per M tile.
        m2 = jnp.mean(hacc, axis=0, keepdims=True)
        v2 = jnp.mean((hacc - m2) ** 2, axis=0, keepdims=True)
        hacc = (hacc - m2) * jax.lax.rsqrt(v2 + BN_EPS) * g2_ref[...] + b2_ref[...]
    h_ref[...] = jnp.maximum(hacc, 0.0).astype(h_ref.dtype)


def branches_fc_pallas(x, w, b, g0, be0, g1, be1, wfc, bfc, g2, b2, *, tile_m=256):
    NBR, B, Cin, E = x.shape
    CE2, M = wfc.shape
    tile_m = _pick_tile(M, tile_m, 128)

    needed = (2 * CE2 * tile_m * 2          # double-buffered bf16 fc-weight tiles
              + B * CE2 * 4                 # zflat scratch
              + CE2 * tile_m * 4            # in-kernel f32 upcast of the weight tile
              + 2 * B * tile_m * 4          # output blocks
              + x.size * 4 + 8 * CE2)       # small resident operands
    return pl.pallas_call(
        _branches_fc_kernel,
        out_shape=jax.ShapeDtypeStruct((B, M), jnp.bfloat16),
        grid=(M // tile_m,),
        in_specs=[_rep_spec(x.shape), _rep_spec(w.shape), _rep_spec(b.shape),
                  _rep_spec(g0.shape), _rep_spec(be0.shape),
                  _rep_spec(g1.shape), _rep_spec(be1.shape),
                  pl.BlockSpec((CE2, tile_m), lambda j: (0, j)),
                  pl.BlockSpec((1, tile_m), lambda j: (0, j)),
                  pl.BlockSpec((1, tile_m), lambda j: (0, j)),
                  pl.BlockSpec((1, tile_m), lambda j: (0, j))],
        out_specs=pl.BlockSpec((B, tile_m), lambda j: (0, j)),
        scratch_shapes=[pltpu.VMEM((B, CE2), jnp.float32)],
        compiler_params=pltpu.CompilerParams(
            dimension_semantics=("parallel",),
            vmem_limit_bytes=_vmem_limit_bytes(needed)),
    )(x, w, b, g0, be0, g1, be1, wfc, bfc, g2, b2)


# ----------------------------------------------------------------------------
# Kernel 2: score = h @ tanh(embedding)^T, tiled over entities.
#           tanh is fused (EUP); operands cast to bf16 for the MXU, f32 accumulate.
# ----------------------------------------------------------------------------
def _score_kernel(h_ref, ent_ref, o_ref):
    # h: (B, M) bf16   ent tile: (tile_n, M) f32 (raw embedding)   o: (B, tile_n) f32
    # Any RHS relayout for the contraction on ent's minor dim is hidden under the
    # f32 HBM stream of the table (memory-bound); revisit if the table goes bf16.
    ent = jnp.tanh(ent_ref[...]).astype(jnp.bfloat16)
    o_ref[...] = jax.lax.dot_general(
        h_ref[...], ent,
        dimension_numbers=(((1,), (1,)), ((), ())),
        preferred_element_type=jnp.float32)


def score_pallas(h, embedding, *, tile_n=4096):
    B, M = h.shape
    N = embedding.shape[0]

    if N >= 128:
        tile_n = max(128, (min(tile_n, N) // 128) * 128)   # lane-dense output tiles
    else:
        tile_n = N
    n_main = (N // tile_n) * tile_n

    needed = 2 * tile_n * M * 4 + 2 * B * tile_n * 4 + 2 * B * M * 2

    pieces = []
    if n_main > 0:
        pieces.append(pl.pallas_call(
            _score_kernel,
            out_shape=jax.ShapeDtypeStruct((B, n_main), jnp.float32),
            grid=(n_main // tile_n,),
            in_specs=[pl.BlockSpec((B, M), lambda j: (0, 0)),
                      pl.BlockSpec((tile_n, M), lambda j: (j, 0))],
            out_specs=pl.BlockSpec((B, tile_n), lambda j: (0, j)),
            compiler_params=pltpu.CompilerParams(
                dimension_semantics=("parallel",),
                vmem_limit_bytes=_vmem_limit_bytes(needed)),
        )(h, embedding))
    if n_main < N:
        # Ragged tail (< tile_n rows): one tiny full-block call on just those rows.
        # Slicing copies only the tail; the full table is never padded or re-written.
        tail = jax.lax.slice_in_dim(embedding, n_main, N, axis=0)
        pieces.append(pl.pallas_call(
            _score_kernel,
            out_shape=jax.ShapeDtypeStruct((B, N - n_main), jnp.float32),
        )(h, tail))
    return pieces[0] if len(pieces) == 1 else jnp.concatenate(pieces, axis=1)


# ----------------------------------------------------------------------------
# Full forward (glue in plain JAX: gathers, stacks, parameter re-layout)
# ----------------------------------------------------------------------------
def convtranse2_forward(params, embedding, emb_rel, triplets, *, tile_n=4096, tile_m=256):
    E = emb_rel.shape[1]

    # tanh only on the B gathered head rows; full-table tanh is fused into the
    # score kernel (no N x 2E HBM round-trip).
    e1 = jnp.tanh(jnp.take(embedding, triplets[:, 0], axis=0))    # (B, 2E)
    rel = jnp.take(emb_rel, triplets[:, 1], axis=0)               # (B, E)
    x = jnp.stack([jnp.stack([e1[:, :E], rel], axis=1),
                   jnp.stack([e1[:, E:], rel], axis=1)], axis=0)  # (2, B, 2, E)

    def to_kernel_w(w):   # torch (C, Cin, K) -> (Cin, K, C, 1)
        return jnp.transpose(w, (1, 2, 0))[..., None]

    def col(v):           # (C,) -> (C, 1)
        return v[:, None]

    w_all = jnp.stack([to_kernel_w(params["conv1_w"]), to_kernel_w(params["conv2_w"])])
    b_all = jnp.stack([col(params["conv1_b"]), col(params["conv2_b"])])
    g0_all = jnp.stack([col(params["bn0_g"]), col(params["bn00_g"])])
    be0_all = jnp.stack([col(params["bn0_b"]), col(params["bn00_b"])])
    g1_all = jnp.stack([col(params["bn1_g"]), col(params["bn11_g"])])
    be1_all = jnp.stack([col(params["bn1_b"]), col(params["bn11_b"])])

    # torch fc_w: (M, F=2*C*E).  Flattened conv features are ordered
    # (branch, channel, position) row-major => fc_w.T is exactly the (2*C*E, M)
    # weight the kernel's flat contraction expects.  Stored/streamed in bf16;
    # the kernel upcasts per tile so the matmul accumulates in f32.
    wfc = params["fc_w"].T.astype(jnp.bfloat16)

    h = branches_fc_pallas(x, w_all, b_all, g0_all, be0_all, g1_all, be1_all,
                           wfc, params["fc_b"][None, :],
                           params["bn2_g"][None, :], params["bn2_b"][None, :],
                           tile_m=tile_m)
    return score_pallas(h, embedding, tile_n=tile_n)


# ----------------------------------------------------------------------------
# Pure-JAX reference (same math, f32, no Pallas) for a correctness check
# ----------------------------------------------------------------------------
def reference_forward(p, embedding, emb_rel, triplets):
    B = triplets.shape[0]
    E = emb_rel.shape[1]
    e1_all = jnp.tanh(embedding)
    e1 = e1_all[triplets[:, 0]].reshape(B, 2, E)
    rel = emb_rel[triplets[:, 1]]
    s1 = jnp.stack([e1[:, 0], rel], axis=1)
    s2 = jnp.stack([e1[:, 1], rel], axis=1)

    def bn(x, g, b, axes):
        m = x.mean(axis=axes, keepdims=True)
        v = ((x - m) ** 2).mean(axis=axes, keepdims=True)
        return (x - m) / jnp.sqrt(v + BN_EPS) * g + b

    def conv1d(x, w, bias):
        k = w.shape[-1]
        y = jax.lax.conv_general_dilated(
            x, w, window_strides=(1,), padding=[(k // 2, k // 2)],
            dimension_numbers=("NCH", "OIH", "NCH"))
        return y + bias[None, :, None]

    def branch(s, w, bias, g0, b0, g1, b1):
        x = bn(s, g0[None, :, None], b0[None, :, None], (0, 2))
        x = conv1d(x, w, bias)
        x = bn(x, g1[None, :, None], b1[None, :, None], (0, 2))
        return jnp.maximum(x, 0.0).reshape(B, -1)

    x1 = branch(s1, p["conv1_w"], p["conv1_b"], p["bn0_g"], p["bn0_b"],
                p["bn1_g"], p["bn1_b"])
    x2 = branch(s2, p["conv2_w"], p["conv2_b"], p["bn00_g"], p["bn00_b"],
                p["bn11_g"], p["bn11_b"])
    x = jnp.concatenate([x1, x2], axis=1)
    x = x @ p["fc_w"].T + p["fc_b"]
    if B > 1:
        x = bn(x, p["bn2_g"][None, :], p["bn2_b"][None, :], (0,))
    x = jnp.maximum(x, 0.0)
    return x @ e1_all.T


# ----------------------------------------------------------------------------
# Deterministic parameter / input construction
# ----------------------------------------------------------------------------
def build_params(key, num_entities, embedding_dim, channels, kernel_size):
    E, C, K = embedding_dim, channels, kernel_size
    ks = jax.random.split(key, 6)
    conv_bound = 1.0 / math.sqrt(2 * K)
    fc_in = E * C * 2
    fc_bound = 1.0 / math.sqrt(fc_in)
    p = {
        "conv1_w": jax.random.uniform(ks[0], (C, 2, K), jnp.float32, -conv_bound, conv_bound),
        "conv1_b": jax.random.uniform(ks[1], (C,), jnp.float32, -conv_bound, conv_bound),
        "conv2_w": jax.random.uniform(ks[2], (C, 2, K), jnp.float32, -conv_bound, conv_bound),
        "conv2_b": jax.random.uniform(ks[3], (C,), jnp.float32, -conv_bound, conv_bound),
        "fc_w": jax.random.uniform(ks[4], (2 * E, fc_in), jnp.float32, -fc_bound, fc_bound),
        "fc_b": jax.random.uniform(ks[5], (2 * E,), jnp.float32, -fc_bound, fc_bound),
        # BatchNorm affine params at their PyTorch defaults (gamma=1, beta=0)
        "bn0_g": jnp.ones((2,), jnp.float32), "bn0_b": jnp.zeros((2,), jnp.float32),
        "bn1_g": jnp.ones((C,), jnp.float32), "bn1_b": jnp.zeros((C,), jnp.float32),
        "bn00_g": jnp.ones((2,), jnp.float32), "bn00_b": jnp.zeros((2,), jnp.float32),
        "bn11_g": jnp.ones((C,), jnp.float32), "bn11_b": jnp.zeros((C,), jnp.float32),
        "bn2_g": jnp.ones((2 * E,), jnp.float32), "bn2_b": jnp.zeros((2 * E,), jnp.float32),
        # self.b (zeros(num_entities)) is registered but unused in forward()
    }
    return p


if __name__ == "__main__":
    NUM_ENTITIES = 256     # N
    NUM_RELATIONS = 16
    EMB_DIM = 32           # module's embedding_dim E (entity embedding dim = 2E)
    CHANNELS = 8
    KERNEL_SIZE = 3
    BATCH = 4

    root = jax.random.PRNGKey(0)
    k_emb, k_rel, k_h, k_r, k_t, k_par = jax.random.split(root, 6)

    embedding = 0.5 * jax.random.normal(k_emb, (NUM_ENTITIES, 2 * EMB_DIM), jnp.float32)
    emb_rel = 0.5 * jax.random.normal(k_rel, (NUM_RELATIONS, EMB_DIM), jnp.float32)
    heads = jax.random.randint(k_h, (BATCH,), 0, NUM_ENTITIES)
    rels = jax.random.randint(k_r, (BATCH,), 0, NUM_RELATIONS)
    tails = jax.random.randint(k_t, (BATCH,), 0, NUM_ENTITIES)
    triplets = jnp.stack([heads, rels, tails], axis=1).astype(jnp.int32)

    params = build_params(k_par, NUM_ENTITIES, EMB_DIM, CHANNELS, KERNEL_SIZE)

    fwd = jax.jit(convtranse2_forward, static_argnames=("tile_n", "tile_m"))
    out = fwd(params, embedding, emb_rel, triplets)
    out = jax.block_until_ready(out)

    ref = reference_forward(params, embedding, emb_rel, triplets)
    ref = jax.block_until_ready(ref)

    assert out.shape == (BATCH, NUM_ENTITIES), out.shape
    # Precision policy vs. the f32 reference: h is stored bf16, the score matmul uses
    # bf16 MXU operands, and the FC weight is stored bf16 (upcast before an f32 dot).
    # bn2 uses batch statistics at B=4, which can amplify per-feature rounding, hence
    # the loosened elementwise tolerance plus an aggregate relative-L2 check.
    err = out - ref
    rel_l2 = float(jnp.linalg.norm(err) / jnp.linalg.norm(ref))
    ok_elem = bool(jnp.allclose(out, ref, rtol=3e-2, atol=1e-1))
    if not (ok_elem and rel_l2 < 2e-2):
        raise AssertionError(
            f"mismatch vs reference: max abs err = {float(jnp.max(jnp.abs(err)))}, "
            f"rel L2 = {rel_l2}")

    # TODO(synk): dropout layers have p=0 in the reference __init__ defaults, so they are
    # identity here; non-zero dropout would need pltpu.prng_* based masking.
    print("KERNEL_OK")
</pallas_src>

<mosaic_0001>
module attributes {stable_mosaic.version = 11 : i64} {
  func.func @_score_kernel(%arg0: i32, %arg1: memref<4x64xbf16, #tpu.memory_space<vmem>>, %arg2: memref<256x64xf32, #tpu.memory_space<vmem>>, %arg3: memref<4x256xf32, #tpu.memory_space<vmem>>) attributes {dimension_semantics = [#tpu.dimension_semantics<parallel>], iteration_bounds = array<i64: 1>, scalar_prefetch = 0 : i64, scratch_operands = 0 : i64, tpu.core_type = #tpu.core_type<tc>, window_params = [{pipeline_mode = #tpu.pipeline_mode<synchronous>, transform_indices = @transform_0, window_bounds = array<i64: 4, 64>}, {transform_indices = @transform_1, window_bounds = array<i64: 256, 64>}, {transform_indices = @transform_2, window_bounds = array<i64: 4, 256>}]} {
    %c0 = arith.constant 0 : index
    %c0_0 = arith.constant 0 : index
    %0 = vector.load %arg2[%c0, %c0_0] : memref<256x64xf32, #tpu.memory_space<vmem>>, vector<256x64xf32>
    %1 = math.tanh %0 : vector<256x64xf32>
    %2 = arith.truncf %1 : vector<256x64xf32> to vector<256x64xbf16>
    %c0_1 = arith.constant 0 : index
    %c0_2 = arith.constant 0 : index
    %3 = vector.load %arg1[%c0_1, %c0_2] : memref<4x64xbf16, #tpu.memory_space<vmem>>, vector<4x64xbf16>
    %cst = arith.constant dense<0.000000e+00> : vector<4x256xf32>
    %4 = tpu.matmul %3, %2, %cst {dimension_numbers = #tpu.dot_dimension_numbers<[1], [1], [0], [0], [0, 0, 1, 0], [], []>} : vector<4x64xbf16>, vector<256x64xbf16>, vector<4x256xf32> -> vector<4x256xf32>
    %c0_3 = arith.constant 0 : index
    %c0_4 = arith.constant 0 : index
    %5 = vector.load %arg3[%c0_3, %c0_4] : memref<4x256xf32, #tpu.memory_space<vmem>>, vector<4x256xf32>
    tpu.vector_store %arg3[%c0_3, %c0_4], %4 {strides = array<i32>} : memref<4x256xf32, #tpu.memory_space<vmem>>, vector<4x256xf32>,
    return
  }
  func.func @transform_0(%arg0: i32) -> (i32, i32) {
    %c0_i32 = arith.constant 0 : i32
    %c0_i32_0 = arith.constant 0 : i32
    %c0_i32_1 = arith.constant 0 : i32
    return %c0_i32, %c0_i32_0 : i32, i32
  }
  func.func @transform_1(%arg0: i32) -> (i32, i32) {
    %c0_i32 = arith.constant 0 : i32
    %c0_i32_0 = arith.constant 0 : i32
    return %arg0, %c0_i32 : i32, i32
  }
  func.func @transform_2(%arg0: i32) -> (i32, i32) {
    %c0_i32 = arith.constant 0 : i32
    %c0_i32_0 = arith.constant 0 : i32
    return %c0_i32, %arg0 : i32, i32
  }
}

module attributes {stable_mosaic.version = 11 : i64} {
  func.func @_branches_fc_kernel(%arg0: i32, %arg1: memref<2x4x2x32xf32, #tpu.memory_space<vmem>>, %arg2: memref<2x2x3x8x1xf32, #tpu.memory_space<vmem>>, %arg3: memref<2x8x1xf32, #tpu.memory_space<vmem>>, %arg4: memref<2x2x1xf32, #tpu.memory_space<vmem>>, %arg5: memref<2x2x1xf32, #tpu.memory_space<vmem>>, %arg6: memref<2x8x1xf32, #tpu.memory_space<vmem>>, %arg7: memref<2x8x1xf32, #tpu.memory_space<vmem>>, %arg8: memref<512x64xbf16, #tpu.memory_space<vmem>>, %arg9: memref<1x64xf32, #tpu.memory_space<vmem>>, %arg10: memref<1x64xf32, #tpu.memory_space<vmem>>, %arg11: memref<1x64xf32, #tpu.memory_space<vmem>>, %arg12: memref<4x64xbf16, #tpu.memory_space<vmem>>, %arg13: memref<4x512xf32, #tpu.memory_space<vmem>>) attributes {dimension_semantics = [#tpu.dimension_semantics<parallel>], iteration_bounds = array<i64: 1>, scalar_prefetch = 0 : i64, scratch_operands = 1 : i64, tpu.core_type = #tpu.core_type<tc>, window_params = [{pipeline_mode = #tpu.pipeline_mode<synchronous>, transform_indices = @transform_0, window_bounds = array<i64: 2, 4, 2, 32>}, {pipeline_mode = #tpu.pipeline_mode<synchronous>, transform_indices = @transform_1, window_bounds = array<i64: 2, 2, 3, 8, 1>}, {pipeline_mode = #tpu.pipeline_mode<synchronous>, transform_indices = @transform_2, window_bounds = array<i64: 2, 8, 1>}, {pipeline_mode = #tpu.pipeline_mode<synchronous>, transform_indices = @transform_3, window_bounds = array<i64: 2, 2, 1>}, {pipeline_mode = #tpu.pipeline_mode<synchronous>, transform_indices = @transform_4, window_bounds = array<i64: 2, 2, 1>}, {pipeline_mode = #tpu.pipeline_mode<synchronous>, transform_indices = @transform_5, window_bounds = array<i64: 2, 8, 1>}, {pipeline_mode = #tpu.pipeline_mode<synchronous>, transform_indices = @transform_6, window_bounds = array<i64: 2, 8, 1>}, {transform_indices = @transform_7, window_bounds = array<i64: 512, 64>}, {transform_indices = @transform_8, window_bounds = array<i64: 1, 64>}, {transform_indices = @transform_9, window_bounds = array<i64: 1, 64>}, {transform_indices = @transform_10, window_bounds = array<i64: 1, 64>}, {transform_indices = @transform_11, window_bounds = array<i64: 4, 64>}]} {
    %0 = tpu.iota {dimensions = array<i32: 2>} : vector<4x2x32xi32>
    %c0 = arith.constant 0 : index
    %c0_0 = arith.constant 0 : index
    %c0_1 = arith.constant 0 : index
    %c0_2 = arith.constant 0 : index
    %1 = vector.load %arg1[%c0, %c0_0, %c0_1, %c0_2] : memref<2x4x2x32xf32, #tpu.memory_space<vmem>>, vector<1x4x2x32xf32>
    %2 = vector.shape_cast %1 : vector<1x4x2x32xf32> to vector<4x2x32xf32>
    %cst = arith.constant dense<0.000000e+00> : vector<4x2xf32>
    %3 = vector.multi_reduction <add>, %2, %cst [2] : vector<4x2x32xf32> to vector<4x2xf32>
    %4 = vector.shape_cast %3 : vector<4x2xf32> to vector<4x2x1xf32>
    %cst_3 = arith.constant 3.200000e+01 : f32
    %5 = vector.broadcast %cst_3 : f32 to vector<4x2x1xf32>
    %6 = arith.divf %4, %5 : vector<4x2x1xf32>
    %cst_4 = arith.constant dense<0.000000e+00> : vector<2x1xf32>
    %7 = vector.multi_reduction <add>, %6, %cst_4 [0] : vector<4x2x1xf32> to vector<2x1xf32>
    %8 = vector.shape_cast %7 : vector<2x1xf32> to vector<1x2x1xf32>
    %cst_5 = arith.constant 4.000000e+00 : f32
    %9 = vector.broadcast %cst_5 : f32 to vector<1x2x1xf32>
    %10 = arith.divf %8, %9 : vector<1x2x1xf32>
    %11 = vector.broadcast %10 : vector<1x2x1xf32> to vector<4x2x32xf32>
    %12 = arith.subf %2, %11 : vector<4x2x32xf32>
    %13 = arith.mulf %12, %12 : vector<4x2x32xf32>
    %cst_6 = arith.constant dense<0.000000e+00> : vector<4x2xf32>
    %14 = vector.multi_reduction <add>, %13, %cst_6 [2] : vector<4x2x32xf32> to vector<4x2xf32>
    %15 = vector.shape_cast %14 : vector<4x2xf32> to vector<4x2x1xf32>
    %cst_7 = arith.constant 3.200000e+01 : f32
    %16 = vector.broadcast %cst_7 : f32 to vector<4x2x1xf32>
    %17 = arith.divf %15, %16 : vector<4x2x1xf32>
    %cst_8 = arith.constant dense<0.000000e+00> : vector<2x1xf32>
    %18 = vector.multi_reduction <add>, %17, %cst_8 [0] : vector<4x2x1xf32> to vector<2x1xf32>
    %19 = vector.shape_cast %18 : vector<2x1xf32> to vector<1x2x1xf32>
    %cst_9 = arith.constant 4.000000e+00 : f32
    %20 = vector.broadcast %cst_9 : f32 to vector<1x2x1xf32>
    %21 = arith.divf %19, %20 : vector<1x2x1xf32>
    %22 = vector.broadcast %10 : vector<1x2x1xf32> to vector<4x2x32xf32>
    %23 = arith.subf %2, %22 : vector<4x2x32xf32>
    %cst_10 = arith.constant 9.99999974E-6 : f32
    %24 = vector.broadcast %cst_10 : f32 to vector<1x2x1xf32>
    %25 = arith.addf %21, %24 : vector<1x2x1xf32>
    %26 = math.rsqrt %25 : vector<1x2x1xf32>
    %27 = vector.broadcast %26 : vector<1x2x1xf32> to vector<4x2x32xf32>
    %28 = arith.mulf %23, %27 : vector<4x2x32xf32>
    %c0_11 = arith.constant 0 : index
    %c0_12 = arith.constant 0 : index
    %c0_13 = arith.constant 0 : index
    %29 = vector.load %arg4[%c0_11, %c0_12, %c0_13] : memref<2x2x1xf32, #tpu.memory_space<vmem>>, vector<1x2x1xf32>
    %30 = vector.shape_cast %29 : vector<1x2x1xf32> to vector<2x1xf32>
    %31 = vector.shape_cast %30 : vector<2x1xf32> to vector<1x2x1xf32>
    %32 = vector.broadcast %31 : vector<1x2x1xf32> to vector<4x2x32xf32>
    %33 = arith.mulf %28, %32 : vector<4x2x32xf32>
    %c0_14 = arith.constant 0 : index
    %c0_15 = arith.constant 0 : index
    %c0_16 = arith.constant 0 : index
    %34 = vector.load %arg5[%c0_14, %c0_15, %c0_16] : memref<2x2x1xf32, #tpu.memory_space<vmem>>, vector<1x2x1xf32>
    %35 = vector.shape_cast %34 : vector<1x2x1xf32> to vector<2x1xf32>
    %36 = vector.shape_cast %35 : vector<2x1xf32> to vector<1x2x1xf32>
    %37 = vector.broadcast %36 : vector<1x2x1xf32> to vector<4x2x32xf32>
    %38 = arith.addf %33, %37 : vector<4x2x32xf32>
    %c1_i32 = arith.constant 1 : i32
    %39 = tpu.dynamic_rotate %38 by %c1_i32 dim 2 : vector<4x2x32xf32>, i32 -> vector<4x2x32xf32>
    %c1_i32_17 = arith.constant 1 : i32
    %40 = vector.broadcast %c1_i32_17 : i32 to vector<4x2x32xi32>
    %41 = arith.cmpi slt, %0, %40 : vector<4x2x32xi32>
    %cst_18 = arith.constant 0.000000e+00 : f32
    %42 = vector.broadcast %cst_18 : f32 to vector<4x2x32xf32>
    %43 = arith.select %41, %42, %39 : vector<4x2x32xi1>, vector<4x2x32xf32>
    %c31_i32 = arith.constant 31 : i32
    %44 = tpu.dynamic_rotate %38 by %c31_i32 dim 2 : vector<4x2x32xf32>, i32 -> vector<4x2x32xf32>
    %c31_i32_19 = arith.constant 31 : i32
    %45 = vector.broadcast %c31_i32_19 : i32 to vector<4x2x32xi32>
    %46 = arith.cmpi sge, %0, %45 : vector<4x2x32xi32>
    %cst_20 = arith.constant 0.000000e+00 : f32
    %47 = vector.broadcast %cst_20 : f32 to vector<4x2x32xf32>
    %48 = arith.select %46, %47, %44 : vector<4x2x32xi1>, vector<4x2x32xf32>
    %cst_21 = arith.constant 0.000000e+00 : f32
    %49 = vector.broadcast %cst_21 : f32 to vector<4x8x32xf32>
    %50 = vector.extract_strided_slice %43 {offsets = [0, 0, 0], sizes = [4, 1, 32], strides = [1, 1, 1]} : vector<4x2x32xf32> to vector<4x1x32xf32>
    %c0_22 = arith.constant 0 : index
    %c0_23 = arith.constant 0 : index
    %c0_24 = arith.constant 0 : index
    %c0_25 = arith.constant 0 : index
    %c0_26 = arith.constant 0 : index
    %51 = vector.load %arg2[%c0_22, %c0_23, %c0_24, %c0_25, %c0_26] : memref<2x2x3x8x1xf32, #tpu.memory_space<vmem>>, vector<1x1x1x8x1xf32>
    %52 = vector.shape_cast %51 : vector<1x1x1x8x1xf32> to vector<8x1xf32>
    %53 = vector.shape_cast %52 : vector<8x1xf32> to vector<1x8x1xf32>
    %54 = vector.broadcast %50 : vector<4x1x32xf32> to vector<4x8x32xf32>
    %55 = vector.broadcast %53 : vector<1x8x1xf32> to vector<4x8x32xf32>
    %56 = arith.mulf %54, %55 : vector<4x8x32xf32>
    %57 = arith.addf %49, %56 : vector<4x8x32xf32>
    %58 = vector.extract_strided_slice %38 {offsets = [0, 0, 0], sizes = [4, 1, 32], strides = [1, 1, 1]} : vector<4x2x32xf32> to vector<4x1x32xf32>
    %c0_27 = arith.constant 0 : index
    %c0_28 = arith.constant 0 : index
    %c1 = arith.constant 1 : index
    %c0_29 = arith.constant 0 : index
    %c0_30 = arith.constant 0 : index
    %59 = vector.load %arg2[%c0_27, %c0_28, %c1, %c0_29, %c0_30] : memref<2x2x3x8x1xf32, #tpu.memory_space<vmem>>, vector<1x1x1x8x1xf32>
    %60 = vector.shape_cast %59 : vector<1x1x1x8x1xf32> to vector<8x1xf32>
    %61 = vector.shape_cast %60 : vector<8x1xf32> to vector<1x8x1xf32>
    %62 = vector.broadcast %58 : vector<4x1x32xf32> to vector<4x8x32xf32>
    %63 = vector.broadcast %61 : vector<1x8x1xf32> to vector<4x8x32xf32>
    %64 = arith.mulf %62, %63 : vector<4x8x32xf32>
    %65 = arith.addf %57, %64 : vector<4x8x32xf32>
    %66 = vector.extract_strided_slice %48 {offsets = [0, 0, 0], sizes = [4, 1, 32], strides = [1, 1, 1]} : vector<4x2x32xf32> to vector<4x1x32xf32>
    %c0_31 = arith.constant 0 : index
    %c0_32 = arith.constant 0 : index
    %c2 = arith.constant 2 : index
    %c0_33 = arith.constant 0 : index
    %c0_34 = arith.constant 0 : index
    %67 = vector.load %arg2[%c0_31, %c0_32, %c2, %c0_33, %c0_34] : memref<2x2x3x8x1xf32, #tpu.memory_space<vmem>>, vector<1x1x1x8x1xf32>
    %68 = vector.shape_cast %67 : vector<1x1x1x8x1xf32> to vector<8x1xf32>
    %69 = vector.shape_cast %68 : vector<8x1xf32> to vector<1x8x1xf32>
    %70 = vector.broadcast %66 : vector<4x1x32xf32> to vector<4x8x32xf32>
    %71 = vector.broadcast %69 : vector<1x8x1xf32> to vector<4x8x32xf32>
    %72 = arith.mulf %70, %71 : vector<4x8x32xf32>
    %73 = arith.addf %65, %72 : vector<4x8x32xf32>
    %74 = vector.extract_strided_slice %43 {offsets = [0, 1, 0], sizes = [4, 1, 32], strides = [1, 1, 1]} : vector<4x2x32xf32> to vector<4x1x32xf32>
    %c0_35 = arith.constant 0 : index
    %c1_36 = arith.constant 1 : index
    %c0_37 = arith.constant 0 : index
    %c0_38 = arith.constant 0 : index
    %c0_39 = arith.constant 0 : index
    %75 = vector.load %arg2[%c0_35, %c1_36, %c0_37, %c0_38, %c0_39] : memref<2x2x3x8x1xf32, #tpu.memory_space<vmem>>, vector<1x1x1x8x1xf32>
    %76 = vector.shape_cast %75 : vector<1x1x1x8x1xf32> to vector<8x1xf32>
    %77 = vector.shape_cast %76 : vector<8x1xf32> to vector<1x8x1xf32>
    %78 = vector.broadcast %74 : vector<4x1x32xf32> to vector<4x8x32xf32>
    %79 = vector.broadcast %77 : vector<1x8x1xf32> to vector<4x8x32xf32>
    %80 = arith.mulf %78, %79 : vector<4x8x32xf32>
    %81 = arith.addf %73, %80 : vector<4x8x32xf32>
    %82 = vector.extract_strided_slice %38 {offsets = [0, 1, 0], sizes = [4, 1, 32], strides = [1, 1, 1]} : vector<4x2x32xf32> to vector<4x1x32xf32>
    %c0_40 = arith.constant 0 : index
    %c1_41 = arith.constant 1 : index
    %c1_42 = arith.constant 1 : index
    %c0_43 = arith.constant 0 : index
    %c0_44 = arith.constant 0 : index
    %83 = vector.load %arg2[%c0_40, %c1_41, %c1_42, %c0_43, %c0_44] : memref<2x2x3x8x1xf32, #tpu.memory_space<vmem>>, vector<1x1x1x8x1xf32>
    %84 = vector.shape_cast %83 : vector<1x1x1x8x1xf32> to vector<8x1xf32>
    %85 = vector.shape_cast %84 : vector<8x1xf32> to vector<1x8x1xf32>
    %86 = vector.broadcast %82 : vector<4x1x32xf32> to vector<4x8x32xf32>
    %87 = vector.broadcast %85 : vector<1x8x1xf32> to vector<4x8x32xf32>
    %88 = arith.mulf %86, %87 : vector<4x8x32xf32>
    %89 = arith.addf %81, %88 : vector<4x8x32xf32>
    %90 = vector.extract_strided_slice %48 {offsets = [0, 1, 0], sizes = [4, 1, 32], strides = [1, 1, 1]} : vector<4x2x32xf32> to vector<4x1x32xf32>
    %c0_45 = arith.constant 0 : index
    %c1_46 = arith.constant 1 : index
    %c2_47 = arith.constant 2 : index
    %c0_48 = arith.constant 0 : index
    %c0_49 = arith.constant 0 : index
    %91 = vector.load %arg2[%c0_45, %c1_46, %c2_47, %c0_48, %c0_49] : memref<2x2x3x8x1xf32, #tpu.memory_space<vmem>>, vector<1x1x1x8x1xf32>
    %92 = vector.shape_cast %91 : vector<1x1x1x8x1xf32> to vector<8x1xf32>
    %93 = vector.shape_cast %92 : vector<8x1xf32> to vector<1x8x1xf32>
    %94 = vector.broadcast %90 : vector<4x1x32xf32> to vector<4x8x32xf32>
    %95 = vector.broadcast %93 : vector<1x8x1xf32> to vector<4x8x32xf32>
    %96 = arith.mulf %94, %95 : vector<4x8x32xf32>
    %97 = arith.addf %89, %96 : vector<4x8x32xf32>
    %c0_50 = arith.constant 0 : index
    %c0_51 = arith.constant 0 : index
    %c0_52 = arith.constant 0 : index
    %98 = vector.load %arg3[%c0_50, %c0_51, %c0_52] : memref<2x8x1xf32, #tpu.memory_space<vmem>>, vector<1x8x1xf32>
    %99 = vector.shape_cast %98 : vector<1x8x1xf32> to vector<8x1xf32>
    %100 = vector.shape_cast %99 : vector<8x1xf32> to vector<1x8x1xf32>
    %101 = vector.broadcast %100 : vector<1x8x1xf32> to vector<4x8x32xf32>
    %102 = arith.addf %97, %101 : vector<4x8x32xf32>
    %cst_53 = arith.constant dense<0.000000e+00> : vector<4x8xf32>
    %103 = vector.multi_reduction <add>, %102, %cst_53 [2] : vector<4x8x32xf32> to vector<4x8xf32>
    %104 = vector.shape_cast %103 : vector<4x8xf32> to vector<4x8x1xf32>
    %cst_54 = arith.constant 3.200000e+01 : f32
    %105 = vector.broadcast %cst_54 : f32 to vector<4x8x1xf32>
    %106 = arith.divf %104, %105 : vector<4x8x1xf32>
    %cst_55 = arith.constant dense<0.000000e+00> : vector<8x1xf32>
    %107 = vector.multi_reduction <add>, %106, %cst_55 [0] : vector<4x8x1xf32> to vector<8x1xf32>
    %108 = vector.shape_cast %107 : vector<8x1xf32> to vector<1x8x1xf32>
    %cst_56 = arith.constant 4.000000e+00 : f32
    %109 = vector.broadcast %cst_56 : f32 to vector<1x8x1xf32>
    %110 = arith.divf %108, %109 : vector<1x8x1xf32>
    %111 = vector.broadcast %110 : vector<1x8x1xf32> to vector<4x8x32xf32>
    %112 = arith.subf %102, %111 : vector<4x8x32xf32>
    %113 = arith.mulf %112, %112 : vector<4x8x32xf32>
    %cst_57 = arith.constant dense<0.000000e+00> : vector<4x8xf32>
    %114 = vector.multi_reduction <add>, %113, %cst_57 [2] : vector<4x8x32xf32> to vector<4x8xf32>
    %115 = vector.shape_cast %114 : vector<4x8xf32> to vector<4x8x1xf32>
    %cst_58 = arith.constant 3.200000e+01 : f32
    %116 = vector.broadcast %cst_58 : f32 to vector<4x8x1xf32>
    %117 = arith.divf %115, %116 : vector<4x8x1xf32>
    %cst_59 = arith.constant dense<0.000000e+00> : vector<8x1xf32>
    %118 = vector.multi_reduction <add>, %117, %cst_59 [0] : vector<4x8x1xf32> to vector<8x1xf32>
    %119 = vector.shape_cast %118 : vector<8x1xf32> to vector<1x8x1xf32>
    %cst_60 = arith.constant 4.000000e+00 : f32
    %120 = vector.broadcast %cst_60 : f32 to vector<1x8x1xf32>
    %121 = arith.divf %119, %120 : vector<1x8x1xf32>
    %122 = vector.broadcast %110 : vector<1x8x1xf32> to vector<4x8x32xf32>
    %123 = arith.subf %102, %122 : vector<4x8x32xf32>
    %cst_61 = arith.constant 9.99999974E-6 : f32
    %124 = vector.broadcast %cst_61 : f32 to vector<1x8x1xf32>
    %125 = arith.addf %121, %124 : vector<1x8x1xf32>
    %126 = math.rsqrt %125 : vector<1x8x1xf32>
    %127 = vector.broadcast %126 : vector<1x8x1xf32> to vector<4x8x32xf32>
    %128 = arith.mulf %123, %127 : vector<4x8x32xf32>
    %c0_62 = arith.constant 0 : index
    %c0_63 = arith.constant 0 : index
    %c0_64 = arith.constant 0 : index
    %129 = vector.load %arg6[%c0_62, %c0_63, %c0_64] : memref<2x8x1xf32, #tpu.memory_space<vmem>>, vector<1x8x1xf32>
    %130 = vector.shape_cast %129 : vector<1x8x1xf32> to vector<8x1xf32>
    %131 = vector.shape_cast %130 : vector<8x1xf32> to vector<1x8x1xf32>
    %132 = vector.broadcast %131 : vector<1x8x1xf32> to vector<4x8x32xf32>
    %133 = arith.mulf %128, %132 : vector<4x8x32xf32>
    %c0_65 = arith.constant 0 : index
    %c0_66 = arith.constant 0 : index
    %c0_67 = arith.constant 0 : index
    %134 = vector.load %arg7[%c0_65, %c0_66, %c0_67] : memref<2x8x1xf32, #tpu.memory_space<vmem>>, vector<1x8x1xf32>
    %135 = vector.shape_cast %134 : vector<1x8x1xf32> to vector<8x1xf32>
    %136 = vector.shape_cast %135 : vector<8x1xf32> to vector<1x8x1xf32>
    %137 = vector.broadcast %136 : vector<1x8x1xf32> to vector<4x8x32xf32>
    %138 = arith.addf %133, %137 : vector<4x8x32xf32>
    %cst_68 = arith.constant 0.000000e+00 : f32
    %139 = vector.broadcast %cst_68 : f32 to vector<4x8x32xf32>
    %140 = arith.maximumf %138, %139 : vector<4x8x32xf32>
    %141 = vector.extract_strided_slice %140 {offsets = [0, 0, 0], sizes = [4, 1, 32], strides = [1, 1, 1]} : vector<4x8x32xf32> to vector<4x1x32xf32>
    %142 = vector.shape_cast %141 : vector<4x1x32xf32> to vector<4x32xf32>
    %c0_69 = arith.constant 0 : index
    %c0_70 = arith.constant 0 : index
    %143 = vector.load %arg13[%c0_69, %c0_70] : memref<4x512xf32, #tpu.memory_space<vmem>>, vector<4x32xf32>
    tpu.vector_store %arg13[%c0_69, %c0_70], %142 {strides = array<i32>} : memref<4x512xf32, #tpu.memory_space<vmem>>, vector<4x32xf32>,
    %144 = vector.extract_strided_slice %140 {offsets = [0, 1, 0], sizes = [4, 1, 32], strides = [1, 1, 1]} : vector<4x8x32xf32> to vector<4x1x32xf32>
    %145 = vector.shape_cast %144 : vector<4x1x32xf32> to vector<4x32xf32>
    %c0_71 = arith.constant 0 : index
    %c32 = arith.constant 32 : index
    %146 = vector.load %arg13[%c0_71, %c32] : memref<4x512xf32, #tpu.memory_space<vmem>>, vector<4x32xf32>
    tpu.vector_store %arg13[%c0_71, %c32], %145 {strides = array<i32>} : memref<4x512xf32, #tpu.memory_space<vmem>>, vector<4x32xf32>,
    %147 = vector.extract_strided_slice %140 {offsets = [0, 2, 0], sizes = [4, 1, 32], strides = [1, 1, 1]} : vector<4x8x32xf32> to vector<4x1x32xf32>
    %148 = vector.shape_cast %147 : vector<4x1x32xf32> to vector<4x32xf32>
    %c0_72 = arith.constant 0 : index
    %c64 = arith.constant 64 : index
    %149 = vector.load %arg13[%c0_72, %c64] : memref<4x512xf32, #tpu.memory_space<vmem>>, vector<4x32xf32>
    tpu.vector_store %arg13[%c0_72, %c64], %148 {strides = array<i32>} : memref<4x512xf32, #tpu.memory_space<vmem>>, vector<4x32xf32>,
    %150 = vector.extract_strided_slice %140 {offsets = [0, 3, 0], sizes = [4, 1, 32], strides = [1, 1, 1]} : vector<4x8x32xf32> to vector<4x1x32xf32>
    %151 = vector.shape_cast %150 : vector<4x1x32xf32> to vector<4x32xf32>
    %c0_73 = arith.constant 0 : index
    %c96 = arith.constant 96 : index
    %152 = vector.load %arg13[%c0_73, %c96] : memref<4x512xf32, #tpu.memory_space<vmem>>, vector<4x32xf32>
    tpu.vector_store %arg13[%c0_73, %c96], %151 {strides = array<i32>} : memref<4x512xf32, #tpu.memory_space<vmem>>, vector<4x32xf32>,
    %153 = vector.extract_strided_slice %140 {offsets = [0, 4, 0], sizes = [4, 1, 32], strides = [1, 1, 1]} : vector<4x8x32xf32> to vector<4x1x32xf32>
    %154 = vector.shape_cast %153 : vector<4x1x32xf32> to vector<4x32xf32>
    %c0_74 = arith.constant 0 : index
    %c128 = arith.constant 128 : index
    %155 = vector.load %arg13[%c0_74, %c128] : memref<4x512xf32, #tpu.memory_space<vmem>>, vector<4x32xf32>
    tpu.vector_store %arg13[%c0_74, %c128], %154 {strides = array<i32>} : memref<4x512xf32, #tpu.memory_space<vmem>>, vector<4x32xf32>,
    %156 = vector.extract_strided_slice %140 {offsets = [0, 5, 0], sizes = [4, 1, 32], strides = [1, 1, 1]} : vector<4x8x32xf32> to vector<4x1x32xf32>
    %157 = vector.shape_cast %156 : vector<4x1x32xf32> to vector<4x32xf32>
    %c0_75 = arith.constant 0 : index
    %c160 = arith.constant 160 : index
    %158 = vector.load %arg13[%c0_75, %c160] : memref<4x512xf32, #tpu.memory_space<vmem>>, vector<4x32xf32>
    tpu.vector_store %arg13[%c0_75, %c160], %157 {strides = array<i32>} : memref<4x512xf32, #tpu.memory_space<vmem>>, vector<4x32xf32>,
    %159 = vector.extract_strided_slice %140 {offsets = [0, 6, 0], sizes = [4, 1, 32], strides = [1, 1, 1]} : vector<4x8x32xf32> to vector<4x1x32xf32>
    %160 = vector.shape_cast %159 : vector<4x1x32xf32> to vector<4x32xf32>
    %c0_76 = arith.constant 0 : index
    %c192 = arith.constant 192 : index
    %161 = vector.load %arg13[%c0_76, %c192] : memref<4x512xf32, #tpu.memory_space<vmem>>, vector<4x32xf32>
    tpu.vector_store %arg13[%c0_76, %c192], %160 {strides = array<i32>} : memref<4x512xf32, #tpu.memory_space<vmem>>, vector<4x32xf32>,
    %162 = vector.extract_strided_slice %140 {offsets = [0, 7, 0], sizes = [4, 1, 32], strides = [1, 1, 1]} : vector<4x8x32xf32> to vector<4x1x32xf32>
    %163 = vector.shape_cast %162 : vector<4x1x32xf32> to vector<4x32xf32>
    %c0_77 = arith.constant 0 : index
    %c224 = arith.constant 224 : index
    %164 = vector.load %arg13[%c0_77, %c224] : memref<4x512xf32, #tpu.memory_space<vmem>>, vector<4x32xf32>
    tpu.vector_store %arg13[%c0_77, %c224], %163 {strides = array<i32>} : memref<4x512xf32, #tpu.memory_space<vmem>>, vector<4x32xf32>,
    %c1_78 = arith.constant 1 : index
    %c0_79 = arith.constant 0 : index
    %c0_80 = arith.constant 0 : index
    %c0_81 = arith.constant 0 : index
    %165 = vector.load %arg1[%c1_78, %c0_79, %c0_80, %c0_81] : memref<2x4x2x32xf32, #tpu.memory_space<vmem>>, vector<1x4x2x32xf32>
    %166 = vector.shape_cast %165 : vector<1x4x2x32xf32> to vector<4x2x32xf32>
    %cst_82 = arith.constant dense<0.000000e+00> : vector<4x2xf32>
    %167 = vector.multi_reduction <add>, %166, %cst_82 [2] : vector<4x2x32xf32> to vector<4x2xf32>
    %168 = vector.shape_cast %167 : vector<4x2xf32> to vector<4x2x1xf32>
    %cst_83 = arith.constant 3.200000e+01 : f32
    %169 = vector.broadcast %cst_83 : f32 to vector<4x2x1xf32>
    %170 = arith.divf %168, %169 : vector<4x2x1xf32>
    %cst_84 = arith.constant dense<0.000000e+00> : vector<2x1xf32>
    %171 = vector.multi_reduction <add>, %170, %cst_84 [0] : vector<4x2x1xf32> to vector<2x1xf32>
    %172 = vector.shape_cast %171 : vector<2x1xf32> to vector<1x2x1xf32>
    %cst_85 = arith.constant 4.000000e+00 : f32
    %173 = vector.broadcast %cst_85 : f32 to vector<1x2x1xf32>
    %174 = arith.divf %172, %173 : vector<1x2x1xf32>
    %175 = vector.broadcast %174 : vector<1x2x1xf32> to vector<4x2x32xf32>
    %176 = arith.subf %166, %175 : vector<4x2x32xf32>
    %177 = arith.mulf %176, %176 : vector<4x2x32xf32>
    %cst_86 = arith.constant dense<0.000000e+00> : vector<4x2xf32>
    %178 = vector.multi_reduction <add>, %177, %cst_86 [2] : vector<4x2x32xf32> to vector<4x2xf32>
    %179 = vector.shape_cast %178 : vector<4x2xf32> to vector<4x2x1xf32>
    %cst_87 = arith.constant 3.200000e+01 : f32
    %180 = vector.broadcast %cst_87 : f32 to vector<4x2x1xf32>
    %181 = arith.divf %179, %180 : vector<4x2x1xf32>
    %cst_88 = arith.constant dense<0.000000e+00> : vector<2x1xf32>
    %182 = vector.multi_reduction <add>, %181, %cst_88 [0] : vector<4x2x1xf32> to vector<2x1xf32>
    %183 = vector.shape_cast %182 : vector<2x1xf32> to vector<1x2x1xf32>
    %cst_89 = arith.constant 4.000000e+00 : f32
    %184 = vector.broadcast %cst_89 : f32 to vector<1x2x1xf32>
    %185 = arith.divf %183, %184 : vector<1x2x1xf32>
    %186 = vector.broadcast %174 : vector<1x2x1xf32> to vector<4x2x32xf32>
    %187 = arith.subf %166, %186 : vector<4x2x32xf32>
    %cst_90 = arith.constant 9.99999974E-6 : f32
    %188 = vector.broadcast %cst_90 : f32 to vector<1x2x1xf32>
    %189 = arith.addf %185, %188 : vector<1x2x1xf32>
    %190 = math.rsqrt %189 : vector<1x2x1xf32>
    %191 = vector.broadcast %190 : vector<1x2x1xf32> to vector<4x2x32xf32>
    %192 = arith.mulf %187, %191 : vector<4x2x32xf32>
    %c1_91 = arith.constant 1 : index
    %c0_92 = arith.constant 0 : index
    %c0_93 = arith.constant 0 : index
    %193 = vector.load %arg4[%c1_91, %c0_92, %c0_93] : memref<2x2x1xf32, #tpu.memory_space<vmem>>, vector<1x2x1xf32>
    %194 = vector.shape_cast %193 : vector<1x2x1xf32> to vector<2x1xf32>
    %195 = vector.shape_cast %194 : vector<2x1xf32> to vector<1x2x1xf32>
    %196 = vector.broadcast %195 : vector<1x2x1xf32> to vector<4x2x32xf32>
    %197 = arith.mulf %192, %196 : vector<4x2x32xf32>
    %c1_94 = arith.constant 1 : index
    %c0_95 = arith.constant 0 : index
    %c0_96 = arith.constant 0 : index
    %198 = vector.load %arg5[%c1_94, %c0_95, %c0_96] : memref<2x2x1xf32, #tpu.memory_space<vmem>>, vector<1x2x1xf32>
    %199 = vector.shape_cast %198 : vector<1x2x1xf32> to vector<2x1xf32>
    %200 = vector.shape_cast %199 : vector<2x1xf32> to vector<1x2x1xf32>
    %201 = vector.broadcast %200 : vector<1x2x1xf32> to vector<4x2x32xf32>
    %202 = arith.addf %197, %201 : vector<4x2x32xf32>
    %c1_i32_97 = arith.constant 1 : i32
    %203 = tpu.dynamic_rotate %202 by %c1_i32_97 dim 2 : vector<4x2x32xf32>, i32 -> vector<4x2x32xf32>
    %c1_i32_98 = arith.constant 1 : i32
    %204 = vector.broadcast %c1_i32_98 : i32 to vector<4x2x32xi32>
    %205 = arith.cmpi slt, %0, %204 : vector<4x2x32xi32>
    %cst_99 = arith.constant 0.000000e+00 : f32
    %206 = vector.broadcast %cst_99 : f32 to vector<4x2x32xf32>
    %207 = arith.select %205, %206, %203 : vector<4x2x32xi1>, vector<4x2x32xf32>
    %c31_i32_100 = arith.constant 31 : i32
    %208 = tpu.dynamic_rotate %202 by %c31_i32_100 dim 2 : vector<4x2x32xf32>, i32 -> vector<4x2x32xf32>
    %c31_i32_101 = arith.constant 31 : i32
    %209 = vector.broadcast %c31_i32_101 : i32 to vector<4x2x32xi32>
    %210 = arith.cmpi sge, %0, %209 : vector<4x2x32xi32>
    %cst_102 = arith.constant 0.000000e+00 : f32
    %211 = vector.broadcast %cst_102 : f32 to vector<4x2x32xf32>
    %212 = arith.select %210, %211, %208 : vector<4x2x32xi1>, vector<4x2x32xf32>
    %cst_103 = arith.constant 0.000000e+00 : f32
    %213 = vector.broadcast %cst_103 : f32 to vector<4x8x32xf32>
    %214 = vector.extract_strided_slice %207 {offsets = [0, 0, 0], sizes = [4, 1, 32], strides = [1, 1, 1]} : vector<4x2x32xf32> to vector<4x1x32xf32>
    %c1_104 = arith.constant 1 : index
    %c0_105 = arith.constant 0 : index
    %c0_106 = arith.constant 0 : index
    %c0_107 = arith.constant 0 : index
    %c0_108 = arith.constant 0 : index
    %215 = vector.load %arg2[%c1_104, %c0_105, %c0_106, %c0_107, %c0_108] : memref<2x2x3x8x1xf32, #tpu.memory_space<vmem>>, vector<1x1x1x8x1xf32>
    %216 = vector.shape_cast %215 : vector<1x1x1x8x1xf32> to vector<8x1xf32>
    %217 = vector.shape_cast %216 : vector<8x1xf32> to vector<1x8x1xf32>
    %218 = vector.broadcast %214 : vector<4x1x32xf32> to vector<4x8x32xf32>
    %219 = vector.broadcast %217 : vector<1x8x1xf32> to vector<4x8x32xf32>
    %220 = arith.mulf %218, %219 : vector<4x8x32xf32>
    %221 = arith.addf %213, %220 : vector<4x8x32xf32>
    %222 = vector.extract_strided_slice %202 {offsets = [0, 0, 0], sizes = [4, 1, 32], strides = [1, 1, 1]} : vector<4x2x32xf32> to vector<4x1x32xf32>
    %c1_109 = arith.constant 1 : index
    %c0_110 = arith.constant 0 : index
    %c1_111 = arith.constant 1 : index
    %c0_112 = arith.constant 0 : index
    %c0_113 = arith.constant 0 : index
    %223 = vector.load %arg2[%c1_109, %c0_110, %c1_111, %c0_112, %c0_113] : memref<2x2x3x8x1xf32, #tpu.memory_space<vmem>>, vector<1x1x1x8x1xf32>
    %224 = vector.shape_cast %223 : vector<1x1x1x8x1xf32> to vector<8x1xf32>
    %225 = vector.shape_cast %224 : vector<8x1xf32> to vector<1x8x1xf32>
    %226 = vector.broadcast %222 : vector<4x1x32xf32> to vector<4x8x32xf32>
    %227 = vector.broadcast %225 : vector<1x8x1xf32> to vector<4x8x32xf32>
    %228 = arith.mulf %226, %227 : vector<4x8x32xf32>
    %229 = arith.addf %221, %228 : vector<4x8x32xf32>
    %230 = vector.extract_strided_slice %212 {offsets = [0, 0, 0], sizes = [4, 1, 32], strides = [1, 1, 1]} : vector<4x2x32xf32> to vector<4x1x32xf32>
    %c1_114 = arith.constant 1 : index
    %c0_115 = arith.constant 0 : index
    %c2_116 = arith.constant 2 : index
    %c0_117 = arith.constant 0 : index
    %c0_118 = arith.constant 0 : index
    %231 = vector.load %arg2[%c1_114, %c0_115, %c2_116, %c0_117, %c0_118] : memref<2x2x3x8x1xf32, #tpu.memory_space<vmem>>, vector<1x1x1x8x1xf32>
    %232 = vector.shape_cast %231 : vector<1x1x1x8x1xf32> to vector<8x1xf32>
    %233 = vector.shape_cast %232 : vector<8x1xf32> to vector<1x8x1xf32>
    %234 = vector.broadcast %230 : vector<4x1x32xf32> to vector<4x8x32xf32>
    %235 = vector.broadcast %233 : vector<1x8x1xf32> to vector<4x8x32xf32>
    %236 = arith.mulf %234, %235 : vector<4x8x32xf32>
    %237 = arith.addf %229, %236 : vector<4x8x32xf32>
    %238 = vector.extract_strided_slice %207 {offsets = [0, 1, 0], sizes = [4, 1, 32], strides = [1, 1, 1]} : vector<4x2x32xf32> to vector<4x1x32xf32>
    %c1_119 = arith.constant 1 : index
    %c1_120 = arith.constant 1 : index
    %c0_121 = arith.constant 0 : index
    %c0_122 = arith.constant 0 : index
    %c0_123 = arith.constant 0 : index
    %239 = vector.load %arg2[%c1_119, %c1_120, %c0_121, %c0_122, %c0_123] : memref<2x2x3x8x1xf32, #tpu.memory_space<vmem>>, vector<1x1x1x8x1xf32>
    %240 = vector.shape_cast %239 : vector<1x1x1x8x1xf32> to vector<8x1xf32>
    %241 = vector.shape_cast %240 : vector<8x1xf32> to vector<1x8x1xf32>
    %242 = vector.broadcast %238 : vector<4x1x32xf32> to vector<4x8x32xf32>
    %243 = vector.broadcast %241 : vector<1x8x1xf32> to vector<4x8x32xf32>
    %244 = arith.mulf %242, %243 : vector<4x8x32xf32>
    %245 = arith.addf %237, %244 : vector<4x8x32xf32>
    %246 = vector.extract_strided_slice %202 {offsets = [0, 1, 0], sizes = [4, 1, 32], strides = [1, 1, 1]} : vector<4x2x32xf32> to vector<4x1x32xf32>
    %c1_124 = arith.constant 1 : index
    %c1_125 = arith.constant 1 : index
    %c1_126 = arith.constant 1 : index
    %c0_127 = arith.constant 0 : index
    %c0_128 = arith.constant 0 : index
    %247 = vector.load %arg2[%c1_124, %c1_125, %c1_126, %c0_127, %c0_128] : memref<2x2x3x8x1xf32, #tpu.memory_space<vmem>>, vector<1x1x1x8x1xf32>
    %248 = vector.shape_cast %247 : vector<1x1x1x8x1xf32> to vector<8x1xf32>
    %249 = vector.shape_cast %248 : vector<8x1xf32> to vector<1x8x1xf32>
    %250 = vector.broadcast %246 : vector<4x1x32xf32> to vector<4x8x32xf32>
    %251 = vector.broadcast %249 : vector<1x8x1xf32> to vector<4x8x32xf32>
    %252 = arith.mulf %250, %251 : vector<4x8x32xf32>
    %253 = arith.addf %245, %252 : vector<4x8x32xf32>
    %254 = vector.extract_strided_slice %212 {offsets = [0, 1, 0], sizes = [4, 1, 32], strides = [1, 1, 1]} : vector<4x2x32xf32> to vector<4x1x32xf32>
    %c1_129 = arith.constant 1 : index
    %c1_130 = arith.constant 1 : index
    %c2_131 = arith.constant 2 : index
    %c0_132 = arith.constant 0 : index
    %c0_133 = arith.constant 0 : index
    %255 = vector.load %arg2[%c1_129, %c1_130, %c2_131, %c0_132, %c0_133] : memref<2x2x3x8x1xf32, #tpu.memory_space<vmem>>, vector<1x1x1x8x1xf32>
    %256 = vector.shape_cast %255 : vector<1x1x1x8x1xf32> to vector<8x1xf32>
    %257 = vector.shape_cast %256 : vector<8x1xf32> to vector<1x8x1xf32>
    %258 = vector.broadcast %254 : vector<4x1x32xf32> to vector<4x8x32xf32>
    %259 = vector.broadcast %257 : vector<1x8x1xf32> to vector<4x8x32xf32>
    %260 = arith.mulf %258, %259 : vector<4x8x32xf32>
    %261 = arith.addf %253, %260 : vector<4x8x32xf32>
    %c1_134 = arith.constant 1 : index
    %c0_135 = arith.constant 0 : index
    %c0_136 = arith.constant 0 : index
    %262 = vector.load %arg3[%c1_134, %c0_135, %c0_136] : memref<2x8x1xf32, #tpu.memory_space<vmem>>, vector<1x8x1xf32>
    %263 = vector.shape_cast %262 : vector<1x8x1xf32> to vector<8x1xf32>
    %264 = vector.shape_cast %263 : vector<8x1xf32> to vector<1x8x1xf32>
    %265 = vector.broadcast %264 : vector<1x8x1xf32> to vector<4x8x32xf32>
    %266 = arith.addf %261, %265 : vector<4x8x32xf32>
    %cst_137 = arith.constant dense<0.000000e+00> : vector<4x8xf32>
    %267 = vector.multi_reduction <add>, %266, %cst_137 [2] : vector<4x8x32xf32> to vector<4x8xf32>
    %268 = vector.shape_cast %267 : vector<4x8xf32> to vector<4x8x1xf32>
    %cst_138 = arith.constant 3.200000e+01 : f32
    %269 = vector.broadcast %cst_138 : f32 to vector<4x8x1xf32>
    %270 = arith.divf %268, %269 : vector<4x8x1xf32>
    %cst_139 = arith.constant dense<0.000000e+00> : vector<8x1xf32>
    %271 = vector.multi_reduction <add>, %270, %cst_139 [0] : vector<4x8x1xf32> to vector<8x1xf32>
    %272 = vector.shape_cast %271 : vector<8x1xf32> to vector<1x8x1xf32>
    %cst_140 = arith.constant 4.000000e+00 : f32
    %273 = vector.broadcast %cst_140 : f32 to vector<1x8x1xf32>
    %274 = arith.divf %272, %273 : vector<1x8x1xf32>
    %275 = vector.broadcast %274 : vector<1x8x1xf32> to vector<4x8x32xf32>
    %276 = arith.subf %266, %275 : vector<4x8x32xf32>
    %277 = arith.mulf %276, %276 : vector<4x8x32xf32>
    %cst_141 = arith.constant dense<0.000000e+00> : vector<4x8xf32>
    %278 = vector.multi_reduction <add>, %277, %cst_141 [2] : vector<4x8x32xf32> to vector<4x8xf32>
    %279 = vector.shape_cast %278 : vector<4x8xf32> to vector<4x8x1xf32>
    %cst_142 = arith.constant 3.200000e+01 : f32
    %280 = vector.broadcast %cst_142 : f32 to vector<4x8x1xf32>
    %281 = arith.divf %279, %280 : vector<4x8x1xf32>
    %cst_143 = arith.constant dense<0.000000e+00> : vector<8x1xf32>
    %282 = vector.multi_reduction <add>, %281, %cst_143 [0] : vector<4x8x1xf32> to vector<8x1xf32>
    %283 = vector.shape_cast %282 : vector<8x1xf32> to vector<1x8x1xf32>
    %cst_144 = arith.constant 4.000000e+00 : f32
    %284 = vector.broadcast %cst_144 : f32 to vector<1x8x1xf32>
    %285 = arith.divf %283, %284 : vector<1x8x1xf32>
    %286 = vector.broadcast %274 : vector<1x8x1xf32> to vector<4x8x32xf32>
    %287 = arith.subf %266, %286 : vector<4x8x32xf32>
    %cst_145 = arith.constant 9.99999974E-6 : f32
    %288 = vector.broadcast %cst_145 : f32 to vector<1x8x1xf32>
    %289 = arith.addf %285, %288 : vector<1x8x1xf32>
    %290 = math.rsqrt %289 : vector<1x8x1xf32>
    %291 = vector.broadcast %290 : vector<1x8x1xf32> to vector<4x8x32xf32>
    %292 = arith.mulf %287, %291 : vector<4x8x32xf32>
    %c1_146 = arith.constant 1 : index
    %c0_147 = arith.constant 0 : index
    %c0_148 = arith.constant 0 : index
    %293 = vector.load %arg6[%c1_146, %c0_147, %c0_148] : memref<2x8x1xf32, #tpu.memory_space<vmem>>, vector<1x8x1xf32>
    %294 = vector.shape_cast %293 : vector<1x8x1xf32> to vector<8x1xf32>
    %295 = vector.shape_cast %294 : vector<8x1xf32> to vector<1x8x1xf32>
    %296 = vector.broadcast %295 : vector<1x8x1xf32> to vector<4x8x32xf32>
    %297 = arith.mulf %292, %296 : vector<4x8x32xf32>
    %c1_149 = arith.constant 1 : index
    %c0_150 = arith.constant 0 : index
    %c0_151 = arith.constant 0 : index
    %298 = vector.load %arg7[%c1_149, %c0_150, %c0_151] : memref<2x8x1xf32, #tpu.memory_space<vmem>>, vector<1x8x1xf32>
    %299 = vector.shape_cast %298 : vector<1x8x1xf32> to vector<8x1xf32>
    %300 = vector.shape_cast %299 : vector<8x1xf32> to vector<1x8x1xf32>
    %301 = vector.broadcast %300 : vector<1x8x1xf32> to vector<4x8x32xf32>
    %302 = arith.addf %297, %301 : vector<4x8x32xf32>
    %cst_152 = arith.constant 0.000000e+00 : f32
    %303 = vector.broadcast %cst_152 : f32 to vector<4x8x32xf32>
    %304 = arith.maximumf %302, %303 : vector<4x8x32xf32>
    %305 = vector.extract_strided_slice %304 {offsets = [0, 0, 0], sizes = [4, 1, 32], strides = [1, 1, 1]} : vector<4x8x32xf32> to vector<4x1x32xf32>
    %306 = vector.shape_cast %305 : vector<4x1x32xf32> to vector<4x32xf32>
    %c0_153 = arith.constant 0 : index
    %c256 = arith.constant 256 : index
    %307 = vector.load %arg13[%c0_153, %c256] : memref<4x512xf32, #tpu.memory_space<vmem>>, vector<4x32xf32>
    tpu.vector_store %arg13[%c0_153, %c256], %306 {strides = array<i32>} : memref<4x512xf32, #tpu.memory_space<vmem>>, vector<4x32xf32>,
    %308 = vector.extract_strided_slice %304 {offsets = [0, 1, 0], sizes = [4, 1, 32], strides = [1, 1, 1]} : vector<4x8x32xf32> to vector<4x1x32xf32>
    %309 = vector.shape_cast %308 : vector<4x1x32xf32> to vector<4x32xf32>
    %c0_154 = arith.constant 0 : index
    %c288 = arith.constant 288 : index
    %310 = vector.load %arg13[%c0_154, %c288] : memref<4x512xf32, #tpu.memory_space<vmem>>, vector<4x32xf32>
    tpu.vector_store %arg13[%c0_154, %c288], %309 {strides = array<i32>} : memref<4x512xf32, #tpu.memory_space<vmem>>, vector<4x32xf32>,
    %311 = vector.extract_strided_slice %304 {offsets = [0, 2, 0], sizes = [4, 1, 32], strides = [1, 1, 1]} : vector<4x8x32xf32> to vector<4x1x32xf32>
    %312 = vector.shape_cast %311 : vector<4x1x32xf32> to vector<4x32xf32>
    %c0_155 = arith.constant 0 : index
    %c320 = arith.constant 320 : index
    %313 = vector.load %arg13[%c0_155, %c320] : memref<4x512xf32, #tpu.memory_space<vmem>>, vector<4x32xf32>
    tpu.vector_store %arg13[%c0_155, %c320], %312 {strides = array<i32>} : memref<4x512xf32, #tpu.memory_space<vmem>>, vector<4x32xf32>,
    %314 = vector.extract_strided_slice %304 {offsets = [0, 3, 0], sizes = [4, 1, 32], strides = [1, 1, 1]} : vector<4x8x32xf32> to vector<4x1x32xf32>
    %315 = vector.shape_cast %314 : vector<4x1x32xf32> to vector<4x32xf32>
    %c0_156 = arith.constant 0 : index
    %c352 = arith.constant 352 : index
    %316 = vector.load %arg13[%c0_156, %c352] : memref<4x512xf32, #tpu.memory_space<vmem>>, vector<4x32xf32>
    tpu.vector_store %arg13[%c0_156, %c352], %315 {strides = array<i32>} : memref<4x512xf32, #tpu.memory_space<vmem>>, vector<4x32xf32>,
    %317 = vector.extract_strided_slice %304 {offsets = [0, 4, 0], sizes = [4, 1, 32], strides = [1, 1, 1]} : vector<4x8x32xf32> to vector<4x1x32xf32>
    %318 = vector.shape_cast %317 : vector<4x1x32xf32> to vector<4x32xf32>
    %c0_157 = arith.constant 0 : index
    %c384 = arith.constant 384 : index
    %319 = vector.load %arg13[%c0_157, %c384] : memref<4x512xf32, #tpu.memory_space<vmem>>, vector<4x32xf32>
    tpu.vector_store %arg13[%c0_157, %c384], %318 {strides = array<i32>} : memref<4x512xf32, #tpu.memory_space<vmem>>, vector<4x32xf32>,
    %320 = vector.extract_strided_slice %304 {offsets = [0, 5, 0], sizes = [4, 1, 32], strides = [1, 1, 1]} : vector<4x8x32xf32> to vector<4x1x32xf32>
    %321 = vector.shape_cast %320 : vector<4x1x32xf32> to vector<4x32xf32>
    %c0_158 = arith.constant 0 : index
    %c416 = arith.constant 416 : index
    %322 = vector.load %arg13[%c0_158, %c416] : memref<4x512xf32, #tpu.memory_space<vmem>>, vector<4x32xf32>
    tpu.vector_store %arg13[%c0_158, %c416], %321 {strides = array<i32>} : memref<4x512xf32, #tpu.memory_space<vmem>>, vector<4x32xf32>,
    %323 = vector.extract_strided_slice %304 {offsets = [0, 6, 0], sizes = [4, 1, 32], strides = [1, 1, 1]} : vector<4x8x32xf32> to vector<4x1x32xf32>
    %324 = vector.shape_cast %323 : vector<4x1x32xf32> to vector<4x32xf32>
    %c0_159 = arith.constant 0 : index
    %c448 = arith.constant 448 : index
    %325 = vector.load %arg13[%c0_159, %c448] : memref<4x512xf32, #tpu.memory_space<vmem>>, vector<4x32xf32>
    tpu.vector_store %arg13[%c0_159, %c448], %324 {strides = array<i32>} : memref<4x512xf32, #tpu.memory_space<vmem>>, vector<4x32xf32>,
    %326 = vector.extract_strided_slice %304 {offsets = [0, 7, 0], sizes = [4, 1, 32], strides = [1, 1, 1]} : vector<4x8x32xf32> to vector<4x1x32xf32>
    %327 = vector.shape_cast %326 : vector<4x1x32xf32> to vector<4x32xf32>
    %c0_160 = arith.constant 0 : index
    %c480 = arith.constant 480 : index
    %328 = vector.load %arg13[%c0_160, %c480] : memref<4x512xf32, #tpu.memory_space<vmem>>, vector<4x32xf32>
    tpu.vector_store %arg13[%c0_160, %c480], %327 {strides = array<i32>} : memref<4x512xf32, #tpu.memory_space<vmem>>, vector<4x32xf32>,
    %c0_161 = arith.constant 0 : index
    %c0_162 = arith.constant 0 : index
    %329 = vector.load %arg13[%c0_161, %c0_162] : memref<4x512xf32, #tpu.memory_space<vmem>>, vector<4x512xf32>
    %c0_163 = arith.constant 0 : index
    %c0_164 = arith.constant 0 : index
    %330 = vector.load %arg8[%c0_163, %c0_164] : memref<512x64xbf16, #tpu.memory_space<vmem>>, vector<512x64xbf16>
    %331 = arith.extf %330 : vector<512x64xbf16> to vector<512x64xf32>
    %cst_165 = arith.constant dense<0.000000e+00> : vector<4x64xf32>
    %332 = tpu.matmul %329, %331, %cst_165 {dimension_numbers = #tpu.dot_dimension_numbers<[1], [0], [0], [1], [0, 0, 1, 1], [], []>} : vector<4x512xf32>, vector<512x64xf32>, vector<4x64xf32> -> vector<4x64xf32>
    %c0_166 = arith.constant 0 : index
    %c0_167 = arith.constant 0 : index
    %333 = vector.load %arg9[%c0_166, %c0_167] : memref<1x64xf32, #tpu.memory_space<vmem>>, vector<1x64xf32>
    %334 = vector.broadcast %333 : vector<1x64xf32> to vector<4x64xf32>
    %335 = arith.addf %332, %334 : vector<4x64xf32>
    %cst_168 = arith.constant dense<0.000000e+00> : vector<64xf32>
    %336 = vector.multi_reduction <add>, %335, %cst_168 [0] : vector<4x64xf32> to vector<64xf32>
    %337 = vector.shape_cast %336 : vector<64xf32> to vector<1x64xf32>
    %cst_169 = arith.constant 4.000000e+00 : f32
    %338 = vector.broadcast %cst_169 : f32 to vector<1x64xf32>
    %339 = arith.divf %337, %338 : vector<1x64xf32>
    %340 = vector.broadcast %339 : vector<1x64xf32> to vector<4x64xf32>
    %341 = arith.subf %335, %340 : vector<4x64xf32>
    %342 = arith.mulf %341, %341 : vector<4x64xf32>
    %cst_170 = arith.constant dense<0.000000e+00> : vector<64xf32>
    %343 = vector.multi_reduction <add>, %342, %cst_170 [0] : vector<4x64xf32> to vector<64xf32>
    %344 = vector.shape_cast %343 : vector<64xf32> to vector<1x64xf32>
    %cst_171 = arith.constant 4.000000e+00 : f32
    %345 = vector.broadcast %cst_171 : f32 to vector<1x64xf32>
    %346 = arith.divf %344, %345 : vector<1x64xf32>
    %347 = vector.broadcast %339 : vector<1x64xf32> to vector<4x64xf32>
    %348 = arith.subf %335, %347 : vector<4x64xf32>
    %cst_172 = arith.constant 9.99999974E-6 : f32
    %349 = vector.broadcast %cst_172 : f32 to vector<1x64xf32>
    %350 = arith.addf %346, %349 : vector<1x64xf32>
    %351 = math.rsqrt %350 : vector<1x64xf32>
    %352 = vector.broadcast %351 : vector<1x64xf32> to vector<4x64xf32>
    %353 = arith.mulf %348, %352 : vector<4x64xf32>
    %c0_173 = arith.constant 0 : index
    %c0_174 = arith.constant 0 : index
    %354 = vector.load %arg10[%c0_173, %c0_174] : memref<1x64xf32, #tpu.memory_space<vmem>>, vector<1x64xf32>
    %355 = vector.broadcast %354 : vector<1x64xf32> to vector<4x64xf32>
    %356 = arith.mulf %353, %355 : vector<4x64xf32>
    %c0_175 = arith.constant 0 : index
    %c0_176 = arith.constant 0 : index
    %357 = vector.load %arg11[%c0_175, %c0_176] : memref<1x64xf32, #tpu.memory_space<vmem>>, vector<1x64xf32>
    %358 = vector.broadcast %357 : vector<1x64xf32> to vector<4x64xf32>
    %359 = arith.addf %356, %358 : vector<4x64xf32>
    %cst_177 = arith.constant 0.000000e+00 : f32
    %360 = vector.broadcast %cst_177 : f32 to vector<4x64xf32>
    %361 = arith.maximumf %359, %360 : vector<4x64xf32>
    %362 = arith.truncf %361 : vector<4x64xf32> to vector<4x64xbf16>
    %c0_178 = arith.constant 0 : index
    %c0_179 = arith.constant 0 : index
    %363 = vector.load %arg12[%c0_178, %c0_179] : memref<4x64xbf16, #tpu.memory_space<vmem>>, vector<4x64xbf16>
    tpu.vector_store %arg12[%c0_178, %c0_179], %362 {strides = array<i32>} : memref<4x64xbf16, #tpu.memory_space<vmem>>, vector<4x64xbf16>,
    return
  }
  func.func @transform_0(%arg0: i32) -> (i32, i32, i32, i32) {
    %c0_i32 = arith.constant 0 : i32
    %c0_i32_0 = arith.constant 0 : i32
    %c0_i32_1 = arith.constant 0 : i32
    %c0_i32_2 = arith.constant 0 : i32
    %c0_i32_3 = arith.constant 0 : i32
    return %c0_i32, %c0_i32_0, %c0_i32_1, %c0_i32_2 : i32, i32, i32, i32
  }
  func.func @transform_1(%arg0: i32) -> (i32, i32, i32, i32, i32) {
    %c0_i32 = arith.constant 0 : i32
    %c0_i32_0 = arith.constant 0 : i32
    %c0_i32_1 = arith.constant 0 : i32
    %c0_i32_2 = arith.constant 0 : i32
    %c0_i32_3 = arith.constant 0 : i32
    %c0_i32_4 = arith.constant 0 : i32
    return %c0_i32, %c0_i32_0, %c0_i32_1, %c0_i32_2, %c0_i32_3 : i32, i32, i32, i32, i32
  }
  func.func @transform_2(%arg0: i32) -> (i32, i32, i32) {
    %c0_i32 = arith.constant 0 : i32
    %c0_i32_0 = arith.constant 0 : i32
    %c0_i32_1 = arith.constant 0 : i32
    %c0_i32_2 = arith.constant 0 : i32
    return %c0_i32, %c0_i32_0, %c0_i32_1 : i32, i32, i32
  }
  func.func @transform_3(%arg0: i32) -> (i32, i32, i32) {
    %c0_i32 = arith.constant 0 : i32
    %c0_i32_0 = arith.constant 0 : i32
    %c0_i32_1 = arith.constant 0 : i32
    %c0_i32_2 = arith.constant 0 : i32
    return %c0_i32, %c0_i32_0, %c0_i32_1 : i32, i32, i32
  }
  func.func @transform_4(%arg0: i32) -> (i32, i32, i32) {
    %c0_i32 = arith.constant 0 : i32
    %c0_i32_0 = arith.constant 0 : i32
    %c0_i32_1 = arith.constant 0 : i32
    %c0_i32_2 = arith.constant 0 : i32
    return %c0_i32, %c0_i32_0, %c0_i32_1 : i32, i32, i32
  }
  func.func @transform_5(%arg0: i32) -> (i32, i32, i32) {
    %c0_i32 = arith.constant 0 : i32
    %c0_i32_0 = arith.constant 0 : i32
    %c0_i32_1 = arith.constant 0 : i32
    %c0_i32_2 = arith.constant 0 : i32
    return %c0_i32, %c0_i32_0, %c0_i32_1 : i32, i32, i32
  }
  func.func @transform_6(%arg0: i32) -> (i32, i32, i32) {
    %c0_i32 = arith.constant 0 : i32
    %c0_i32_0 = arith.constant 0 : i32
    %c0_i32_1 = arith.constant 0 : i32
    %c0_i32_2 = arith.constant 0 : i32
    return %c0_i32, %c0_i32_0, %c0_i32_1 : i32, i32, i32
  }
  func.func @transform_7(%arg0: i32) -> (i32, i32) {
    %c0_i32 = arith.constant 0 : i32
    %c0_i32_0 = arith.constant 0 : i32
    return %c0_i32, %arg0 : i32, i32
  }
  func.func @transform_8(%arg0: i32) -> (i32, i32) {
    %c0_i32 = arith.constant 0 : i32
    %c0_i32_0 = arith.constant 0 : i32
    return %c0_i32, %arg0 : i32, i32
  }
  func.func @transform_9(%arg0: i32) -> (i32, i32) {
    %c0_i32 = arith.constant 0 : i32
    %c0_i32_0 = arith.constant 0 : i32
    return %c0_i32, %arg0 : i32, i32
  }
  func.func @transform_10(%arg0: i32) -> (i32, i32) {
    %c0_i32 = arith.constant 0 : i32
    %c0_i32_0 = arith.constant 0 : i32
    return %c0_i32, %arg0 : i32, i32
  }
  func.func @transform_11(%arg0: i32) -> (i32, i32) {
    %c0_i32 = arith.constant 0 : i32
    %c0_i32_0 = arith.constant 0 : i32
    return %c0_i32, %arg0 : i32, i32
  }
}

</mosaic_0001>

<llo_original>
// kernel: convtranse2_forward.3
$region0: #{convtranse2_forward.3}
  #allocation0 [shape = 'u32[]', space=smem, size = 0x4, offset = 0x4, fixed_abs, tag = 'smem constant byte address 0x4 - core index']
  #allocation1 [shape = 'u32[72,128]{1,0:T(1,128)}', space=vmem, size = 0x9000, scoped, tag = 'internal scratch']
  %s0 = inlined_call_operand.vmem [shape: bf16[4,64], index: 0, kind: input, shape index: {}]
  %s1 = inlined_call_operand.vmem [shape: f32[256,64], index: 1, kind: input, shape index: {}]
  %s2 = inlined_call_operand.hbm [shape: f32[4,256], index: 2, kind: output, shape index: {}]
  %s3 = sld [smem:[#allocation0]]
  $region18: #{convtranse2_forward.3} parent=0
    _
  %s5 = ssub.s32 1, %s3
  %s6 = scalar_select 0, %s5, %s3
  $region1: #{convtranse2_forward.3} parent=0
    #allocation2 [shape = 'u8[4096]{0}', space=vmem, size = 0x1000, scoped, tag = 'output window, operand 0, single buffered']
    #allocation3 [shape = 's32[1]{0}', space=sflag, size = 0x4, scoped, tag = 'scoped memory for convtranse2_forward.3']
    %7 = vsyncpa [#allocation3], 0
    // Predicated region
    $region2: #{convtranse2_forward.3} parent=1 // pred_check
      _
    $region3: #{convtranse2_forward.3} parent=1 // pred_check_branch
      %9 = sbr.rel (0) target = $region5
    $region4: #{convtranse2_forward.3} parent=1 // pred_region
      _
    $region5: #{convtranse2_forward.3} parent=1 // pred_fallthru
      _
    // Predicated region
    $region6: #{convtranse2_forward.3} parent=1 // pred_check
      _
    $region7: #{convtranse2_forward.3} parent=1 // pred_check_branch
      %11 = sbr.rel (0) target = $region9
    $region8: #{convtranse2_forward.3} parent=1 // pred_region
      _
    $region9: #{convtranse2_forward.3} parent=1 // pred_fallthru
      _
    %v12 = vld [vmem:[%s1] sm:$0xff]
    %v13 = vld [vmem:[%s1 + $0x8] sm:$0xff]
    %v14 = vld [vmem:[%s1 + $0x10] sm:$0xff]
    %v15 = vld [vmem:[%s1 + $0x18] sm:$0xff]
    %v16 = vld [vmem:[%s1 + $0x20] sm:$0xff]
    %v17 = vld [vmem:[%s1 + $0x28] sm:$0xff]
    %v18 = vld [vmem:[%s1 + $0x30] sm:$0xff]
    %v19 = vld [vmem:[%s1 + $0x38] sm:$0xff]
    %v20 = vld [vmem:[%s1 + $0x40] sm:$0xff]
    %v21 = vld [vmem:[%s1 + $0x48] sm:$0xff]
    %v22 = vld [vmem:[%s1 + $0x50] sm:$0xff]
    %v23 = vld [vmem:[%s1 + $0x58] sm:$0xff]
    %v24 = vld [vmem:[%s1 + $0x60] sm:$0xff]
    %v25 = vld [vmem:[%s1 + $0x68] sm:$0xff]
    %v26 = vld [vmem:[%s1 + $0x70] sm:$0xff]
    %v27 = vld [vmem:[%s1 + $0x78] sm:$0xff]
    %v28 = vld [vmem:[%s1 + $0x80] sm:$0xff]
    %v29 = vld [vmem:[%s1 + $0x88] sm:$0xff]
    %v30 = vld [vmem:[%s1 + $0x90] sm:$0xff]
    %v31 = vld [vmem:[%s1 + $0x98] sm:$0xff]
    %v32 = vld [vmem:[%s1 + $0xa0] sm:$0xff]
    %v33 = vld [vmem:[%s1 + $0xa8] sm:$0xff]
    %v34 = vld [vmem:[%s1 + $0xb0] sm:$0xff]
    %v35 = vld [vmem:[%s1 + $0xb8] sm:$0xff]
    %v36 = vld [vmem:[%s1 + $0xc0] sm:$0xff]
    %v37 = vld [vmem:[%s1 + $0xc8] sm:$0xff]
    %v38 = vld [vmem:[%s1 + $0xd0] sm:$0xff]
    %v39 = vld [vmem:[%s1 + $0xd8] sm:$0xff]
    %v40 = vld [vmem:[%s1 + $0xe0] sm:$0xff]
    %v41 = vld [vmem:[%s1 + $0xe8] sm:$0xff]
    %v42 = vld [vmem:[%s1 + $0xf0] sm:$0xff]
    %v43 = vld [vmem:[%s1 + $0xf8] sm:$0xff]
    %v44 = vtanh.pop %v12
    %v45 = vtanh.pop %v13
    %v46 = vtanh.pop %v14
    %v47 = vtanh.pop %v15
    %v48 = vtanh.pop %v16
    %v49 = vtanh.pop %v17
    %v50 = vtanh.pop %v18
    %v51 = vtanh.pop %v19
    %v52 = vtanh.pop %v20
    %v53 = vtanh.pop %v21
    %v54 = vtanh.pop %v22
    %v55 = vtanh.pop %v23
    %v56 = vtanh.pop %v24
    %v57 = vtanh.pop %v25
    %v58 = vtanh.pop %v26
    %v59 = vtanh.pop %v27
    %v60 = vtanh.pop %v28
    %v61 = vtanh.pop %v29
    %v62 = vtanh.pop %v30
    %v63 = vtanh.pop %v31
    %v64 = vtanh.pop %v32
    %v65 = vtanh.pop %v33
    %v66 = vtanh.pop %v34
    %v67 = vtanh.pop %v35
    %v68 = vtanh.pop %v36
    %v69 = vtanh.pop %v37
    %v70 = vtanh.pop %v38
    %v71 = vtanh.pop %v39
    %v72 = vtanh.pop %v40
    %v73 = vtanh.pop %v41
    %v74 = vtanh.pop %v42
    %v75 = vtanh.pop %v43
    %v76 = vpack.c.bf16 %v45, %v44
    %v77 = vpack.c.bf16 %v47, %v46
    %v78 = vpack.c.bf16 %v49, %v48
    %v79 = vpack.c.bf16 %v51, %v50
    %v80 = vpack.c.bf16 %v53, %v52
    %v81 = vpack.c.bf16 %v55, %v54
    %v82 = vpack.c.bf16 %v57, %v56
    %v83 = vpack.c.bf16 %v59, %v58
    %v84 = vpack.c.bf16 %v61, %v60
    %v85 = vpack.c.bf16 %v63, %v62
    %v86 = vpack.c.bf16 %v65, %v64
    %v87 = vpack.c.bf16 %v67, %v66
    %v88 = vpack.c.bf16 %v69, %v68
    %v89 = vpack.c.bf16 %v71, %v70
    %v90 = vpack.c.bf16 %v73, %v72
    %v91 = vpack.c.bf16 %v75, %v74
    %v92 = vld [vmem:[%s0] sm:$0x3]
    %vm93 = vcmask 523264
    %v95 = vsel %vm93, %v92, 0
    %v98 = vsel %vm93, %v76, 0
    %v101 = vsel %vm93, %v77, 0
    %v104 = vsel %vm93, %v78, 0
    %v107 = vsel %vm93, %v79, 0
    %v110 = vsel %vm93, %v80, 0
    %v113 = vsel %vm93, %v81, 0
    %v116 = vsel %vm93, %v82, 0
    %v119 = vsel %vm93, %v83, 0
    %v122 = vsel %vm93, %v84, 0
    %v125 = vsel %vm93, %v85, 0
    %v128 = vsel %vm93, %v86, 0
    %v131 = vsel %vm93, %v87, 0
    %v134 = vsel %vm93, %v88, 0
    %v137 = vsel %vm93, %v89, 0
    %v140 = vsel %vm93, %v90, 0
    %v143 = vsel %vm93, %v91, 0
    %145 = vmatpush.bf16.xpose.msra.mxu0 %v119
    %146 = vmatpush.bf16.xpose.msra.mxu0 %v116
    %147 = vmatpush.bf16.xpose.msra.mxu0 %v113
    %148 = vmatpush.bf16.xpose.msra.mxu0 %v110
    %149 = vmatpush.bf16.xpose.msra.mxu0 %v107
    %150 = vmatpush.bf16.xpose.msra.mxu0 %v104
    %151 = vmatpush.bf16.xpose.msra.mxu0 %v101
    %152 = vmatpush.bf16.xpose.msra.mxu0 %v98
    %153 = vmatmul.bf16.gmra.mxu0 %v95
    %v154 = vpop.f32.mrf.mxu0
    %v155 = vadd.f32 0.0, %v154
    %v156 = vpop.f32.mrf.mxu0
    %157 = vdwg.mxu0
    %158 = vmatpush.bf16.xpose.msra.mxu0 %v143
    %159 = vmatpush.bf16.xpose.msra.mxu0 %v140
    %160 = vmatpush.bf16.xpose.msra.mxu0 %v137
    %161 = vmatpush.bf16.xpose.msra.mxu0 %v134
    %162 = vmatpush.bf16.xpose.msra.mxu0 %v131
    %163 = vmatpush.bf16.xpose.msra.mxu0 %v128
    %164 = vmatpush.bf16.xpose.msra.mxu0 %v125
    %165 = vmatpush.bf16.xpose.msra.mxu0 %v122
    %166 = vmatmul.bf16.gmra.mxu0 %v95
    %v167 = vpop.f32.mrf.mxu0
    %v168 = vadd.f32 0.0, %v167
    %v169 = vpop.f32.mrf.mxu0
    %170 = vdwg.mxu0
    %v173 = vrot.slane %v168, 4
    %vm174 = vcmask 1043456
    %v175 = vsel %vm174, %v155, %v173
    %177 = vst [vmem:[#allocation2] sm:$0xff] %v175
    // Predicated region
    $region10: #{convtranse2_forward.3} parent=1 // pred_check
      _
    $region11: #{convtranse2_forward.3} parent=1 // pred_check_branch
      %179 = sbr.rel (0) target = $region13
    $region12: #{convtranse2_forward.3} parent=1 // pred_region
      %181 = vsyncadd [#allocation3], 0
      %s183 = sshll.u32 [#allocation2], 4
      %s184 = int_to_ptr.vmem [resolvable:$true] %s183
      %s185 = sshll.u32 %s2, 4
      %s186 = int_to_ptr.hbm [resolvable:$true] %s185
      %188 = dma.vmem_to_hbm [thread:$0]  %s184, 128, %s186, [#allocation3]
    $region13: #{convtranse2_forward.3} parent=1 // pred_fallthru
      _
    // Predicated region
    $region14: #{convtranse2_forward.3} parent=1 // pred_check
      _
    $region15: #{convtranse2_forward.3} parent=1 // pred_check_branch
      %190 = sbr.rel (0) target = $region17
    $region16: #{convtranse2_forward.3} parent=1 // pred_region
      %192 = dma.done [#allocation3], 128
    $region17: #{convtranse2_forward.3} parent=1 // pred_fallthru
      _
    %193 = vsyncpa [#allocation3], 1

// kernel: convtranse2_forward.2
$region0: #{convtranse2_forward.2}
  #allocation0 [shape = 'u32[]', space=smem, size = 0x4, offset = 0x4, fixed_abs, tag = 'smem constant byte address 0x4 - core index']
  #allocation1 [shape = 'u32[72,128]{1,0:T(1,128)}', space=vmem, size = 0x9000, scoped, tag = 'internal scratch']
  #allocation2 [shape = 'f32[4,512]{1,0:T(4,128)}', space=vmem, size = 0x2000, scoped, tag = 'scratch operand']
  %s0 = inlined_call_operand.vmem [shape: f32[2,4,2,32], index: 0, kind: input, shape index: {}]
  %s1 = inlined_call_operand.vmem [shape: f32[2,2,3,8,1], index: 1, kind: input, shape index: {}]
  %s2 = inlined_call_operand.vmem [shape: f32[2,8,1], index: 2, kind: input, shape index: {}]
  %s3 = inlined_call_operand.vmem [shape: f32[2,2,1], index: 3, kind: input, shape index: {}]
  %s4 = inlined_call_operand.vmem [shape: f32[2,2,1], index: 4, kind: input, shape index: {}]
  %s5 = inlined_call_operand.vmem [shape: f32[2,8,1], index: 5, kind: input, shape index: {}]
  %s6 = inlined_call_operand.vmem [shape: f32[2,8,1], index: 6, kind: input, shape index: {}]
  %s7 = inlined_call_operand.vmem [shape: bf16[512,64], index: 7, kind: input, shape index: {}]
  %s8 = inlined_call_operand.vmem [shape: f32[1,64], index: 8, kind: input, shape index: {}]
  %s9 = inlined_call_operand.vmem [shape: f32[1,64], index: 9, kind: input, shape index: {}]
  %s10 = inlined_call_operand.vmem [shape: f32[1,64], index: 10, kind: input, shape index: {}]
  %s11 = inlined_call_operand.vmem [shape: bf16[4,64], index: 11, kind: output, shape index: {}]
  %s12 = sld [smem:[#allocation0]]
  $region54: #{convtranse2_forward.2} parent=0
    _
  %s14 = ssub.s32 1, %s12
  %s15 = scalar_select 0, %s14, %s12
  // Predicated region
  $region2: #{convtranse2_forward.2} parent=0 // pred_check
    _
  $region3: #{convtranse2_forward.2} parent=0 // pred_check_branch
    %17 = sbr.rel (0) target = $region5
  $region4: #{convtranse2_forward.2} parent=0 // pred_region
    _
  $region5: #{convtranse2_forward.2} parent=0 // pred_fallthru
    _
  // Predicated region
  $region6: #{convtranse2_forward.2} parent=0 // pred_check
    _
  $region7: #{convtranse2_forward.2} parent=0 // pred_check_branch
    %19 = sbr.rel (0) target = $region9
  $region8: #{convtranse2_forward.2} parent=0 // pred_region
    _
  $region9: #{convtranse2_forward.2} parent=0 // pred_fallthru
    _
  // Predicated region
  $region10: #{convtranse2_forward.2} parent=0 // pred_check
    _
  $region11: #{convtranse2_forward.2} parent=0 // pred_check_branch
    %21 = sbr.rel (0) target = $region13
  $region12: #{convtranse2_forward.2} parent=0 // pred_region
    _
  $region13: #{convtranse2_forward.2} parent=0 // pred_fallthru
    _
  // Predicated region
  $region14: #{convtranse2_forward.2} parent=0 // pred_check
    _
  $region15: #{convtranse2_forward.2} parent=0 // pred_check_branch
    %23 = sbr.rel (0) target = $region17
  $region16: #{convtranse2_forward.2} parent=0 // pred_region
    _
  $region17: #{convtranse2_forward.2} parent=0 // pred_fallthru
    _
  // Predicated region
  $region18: #{convtranse2_forward.2} parent=0 // pred_check
    _
  $region19: #{convtranse2_forward.2} parent=0 // pred_check_branch
    %25 = sbr.rel (0) target = $region21
  $region20: #{convtranse2_forward.2} parent=0 // pred_region
    _
  $region21: #{convtranse2_forward.2} parent=0 // pred_fallthru
    _
  // Predicated region
  $region22: #{convtranse2_forward.2} parent=0 // pred_check
    _
  $region23: #{convtranse2_forward.2} parent=0 // pred_check_branch
    %27 = sbr.rel (0) target = $region25
  $region24: #{convtranse2_forward.2} parent=0 // pred_region
    _
  $region25: #{convtranse2_forward.2} parent=0 // pred_fallthru
    _
  // Predicated region
  $region26: #{convtranse2_forward.2} parent=0 // pred_check
    _
  $region27: #{convtranse2_forward.2} parent=0 // pred_check_branch
    %29 = sbr.rel (0) target = $region29
  $region28: #{convtranse2_forward.2} parent=0 // pred_region
    _
  $region29: #{convtranse2_forward.2} parent=0 // pred_fallthru
    _
  // Predicated region
  $region30: #{convtranse2_forward.2} parent=0 // pred_check
    _
  $region31: #{convtranse2_forward.2} parent=0 // pred_check_branch
    %31 = sbr.rel (0) target = $region33
  $region32: #{convtranse2_forward.2} parent=0 // pred_region
    _
  $region33: #{convtranse2_forward.2} parent=0 // pred_fallthru
    _
  // Predicated region
  $region34: #{convtranse2_forward.2} parent=0 // pred_check
    _
  $region35: #{convtranse2_forward.2} parent=0 // pred_check_branch
    %33 = sbr.rel (0) target = $region37
  $region36: #{convtranse2_forward.2} parent=0 // pred_region
    _
  $region37: #{convtranse2_forward.2} parent=0 // pred_fallthru
    _
  // Predicated region
  $region38: #{convtranse2_forward.2} parent=0 // pred_check
    _
  $region39: #{convtranse2_forward.2} parent=0 // pred_check_branch
    %35 = sbr.rel (0) target = $region41
  $region40: #{convtranse2_forward.2} parent=0 // pred_region
    _
  $region41: #{convtranse2_forward.2} parent=0 // pred_fallthru
    _
  // Predicated region
  $region42: #{convtranse2_forward.2} parent=0 // pred_check
    _
  $region43: #{convtranse2_forward.2} parent=0 // pred_check_branch
    %37 = sbr.rel (0) target = $region45
  $region44: #{convtranse2_forward.2} parent=0 // pred_region
    _
  $region45: #{convtranse2_forward.2} parent=0 // pred_fallthru
    _
  %v38 = vlaneseq
  %v39 = vand.u32 %v38, 127
  %v40 = vld [vmem:[%s0] sm:$0x3]
  %v41 = vld [vmem:[%s0 + $0x2] sm:$0x3]
  %v42 = vld [vmem:[%s0 + $0x4] sm:$0x3]
  %v43 = vld [vmem:[%s0 + $0x6] sm:$0x3]
  %vm44 = vcmask 254976
  %v45 = vsel %vm44, %v40, 0.0
  %46 = vadd.xlane.f32.xlu0 %v45
  %v47 = vpop.xlane.xlu0 %46
  %v48 = vsel %vm44, %v41, 0.0
  %49 = vadd.xlane.f32.xlu0 %v48
  %v50 = vpop.xlane.xlu0 %49
  %v51 = vsel %vm44, %v42, 0.0
  %52 = vadd.xlane.f32.xlu0 %v51
  %v53 = vpop.xlane.xlu0 %52
  %v54 = vsel %vm44, %v43, 0.0
  %55 = vadd.xlane.f32.xlu0 %v54
  %v56 = vpop.xlane.xlu0 %55
  %v57 = vrcp.pop 32.0
  %v58 = vmul.f32 32.0, %v57
  %v59 = vsub.f32 1.0, %v58
  %v60 = vmul.f32 %v57, %v59
  %v61 = vadd.f32 %v57, %v60
  %vm62 = vweird.f32 %v57
  %v63 = vsel %vm62, %v57, %v61
  %v64 = vmul.f32 %v47, %v63
  %v65 = vmul.f32 %v50, %v63
  %v66 = vmul.f32 %v53, %v63
  %v67 = vmul.f32 %v56, %v63
  %vm68 = vcmask 1041408
  %v69 = vsel %vm68, %v64, 0.0
  %v70 = vsel %vm68, %v65, 0.0
  %v71 = vadd.f32 %v69, %v70
  %v72 = vsel %vm68, %v66, 0.0
  %v73 = vadd.f32 %v71, %v72
  %v74 = vsel %vm68, %v67, 0.0
  %v75 = vadd.f32 %v73, %v74
  %v76 = vrcp.pop 4.0
  %v77 = vmul.f32 4.0, %v76
  %v78 = vsub.f32 1.0, %v77
  %v79 = vmul.f32 %v76, %v78
  %v80 = vadd.f32 %v76, %v79
  %vm81 = vweird.f32 %v76
  %v82 = vsel %vm81, %v76, %v80
  %v83 = vmul.f32 %v75, %v82
  %v84 = vsub.f32 %v40, %v83
  %v85 = vsub.f32 %v41, %v83
  %v86 = vsub.f32 %v42, %v83
  %v87 = vsub.f32 %v43, %v83
  %v88 = vmul.f32 %v84, %v84
  %v89 = vmul.f32 %v85, %v85
  %v90 = vmul.f32 %v86, %v86
  %v91 = vmul.f32 %v87, %v87
  %v92 = vsel %vm44, %v88, 0.0
  %93 = vadd.xlane.f32.xlu0 %v92
  %v94 = vpop.xlane.xlu0 %93
  %v95 = vsel %vm44, %v89, 0.0
  %96 = vadd.xlane.f32.xlu0 %v95
  %v97 = vpop.xlane.xlu0 %96
  %v98 = vsel %vm44, %v90, 0.0
  %99 = vadd.xlane.f32.xlu0 %v98
  %v100 = vpop.xlane.xlu0 %99
  %v101 = vsel %vm44, %v91, 0.0
  %102 = vadd.xlane.f32.xlu0 %v101
  %v103 = vpop.xlane.xlu0 %102
  %v104 = vmul.f32 %v94, %v63
  %v105 = vmul.f32 %v97, %v63
  %v106 = vmul.f32 %v100, %v63
  %v107 = vmul.f32 %v103, %v63
  %v108 = vsel %vm68, %v104, 0.0
  %v109 = vsel %vm68, %v105, 0.0
  %v110 = vadd.f32 %v108, %v109
  %v111 = vsel %vm68, %v106, 0.0
  %v112 = vadd.f32 %v110, %v111
  %v113 = vsel %vm68, %v107, 0.0
  %v114 = vadd.f32 %v112, %v113
  %v115 = vmul.f32 %v114, %v82
  %v116 = vadd.f32 %v115, 1e-05
  %v117 = vrsqrt.pop %v116
  %v118 = vmul.f32 %v117, %v116
  %v119 = vmul.f32 %v118, %v117
  %v120 = vmul.f32 0.5, %v119
  %v121 = vsub.f32 1.5, %v120
  %v122 = vmul.f32 %v117, %v121
  %vm123 = vweird.f32 %v116
  %vm124 = vweird.f32 %v117
  %vm125 = vmor %vm123, %vm124
  %v126 = vsel %vm125, %v117, %v122
  %v127 = vmul.f32 %v84, %v126
  %v128 = vmul.f32 %v85, %v126
  %v129 = vmul.f32 %v86, %v126
  %v130 = vmul.f32 %v87, %v126
  %v131 = vld [vmem:[%s3] sm:$0x3]
  %133 = vset.pattern.permute.xlu0 0
  %134 = vperm.xlu0 %133, %v131
  %v135 = vpop.permute.xlu0 %134
  %v137 = vmul.f32 %v127, %v135
  %v138 = vmul.f32 %v128, %v135
  %v139 = vmul.f32 %v129, %v135
  %v140 = vmul.f32 %v130, %v135
  %v141 = vld [vmem:[%s4] sm:$0x3]
  %143 = vset.pattern.permute.xlu0 0
  %144 = vperm.xlu0 %143, %v141
  %v145 = vpop.permute.xlu0 %144
  %v147 = vadd.f32 %v137, %v145
  %v148 = vadd.f32 %v138, %v145
  %v149 = vadd.f32 %v139, %v145
  %v150 = vadd.f32 %v140, %v145
  %vm151 = vcmask 1047808
  %152 = vrot.lane.b32.xlu0 %v147, 32
  %v153 = vpop.permute.xlu0 %152
  %v154 = vsel %vm151, %v153, %v147
  %155 = vrot.lane.b32.xlu0 %v148, 32
  %v156 = vpop.permute.xlu0 %155
  %v157 = vsel %vm151, %v156, %v148
  %158 = vrot.lane.b32.xlu0 %v149, 32
  %v159 = vpop.permute.xlu0 %158
  %v160 = vsel %vm151, %v159, %v149
  %161 = vrot.lane.b32.xlu0 %v150, 32
  %v162 = vpop.permute.xlu0 %161
  %v163 = vsel %vm151, %v162, %v150
  %164 = vrot.lane.b32.xlu0 %v154, 32
  %v165 = vpop.permute.xlu0 %164
  %166 = vrot.lane.b32.xlu0 %v157, 32
  %v167 = vpop.permute.xlu0 %166
  %168 = vrot.lane.b32.xlu0 %v160, 32
  %v169 = vpop.permute.xlu0 %168
  %170 = vrot.lane.b32.xlu0 %v163, 32
  %v171 = vpop.permute.xlu0 %170
  %v172 = vsel %vm151, %v165, %v147
  %v173 = vsel %vm151, %v167, %v148
  %v174 = vsel %vm151, %v169, %v149
  %v175 = vsel %vm151, %v171, %v150
  %vm176 = vcmp.lt.s32.totalorder %v39, 1
  %181 = vrot.lane.b32.xlu0 %v172, 97
  %v182 = vpop.permute.xlu0 %181
  %183 = vrot.lane.b32.xlu0 %v173, 97
  %v184 = vpop.permute.xlu0 %183
  %185 = vrot.lane.b32.xlu0 %v174, 97
  %v186 = vpop.permute.xlu0 %185
  %187 = vrot.lane.b32.xlu0 %v175, 97
  %v188 = vpop.permute.xlu0 %187
  %v193 = vsel %vm176, 0.0, %v182
  %v194 = vsel %vm176, 0.0, %v184
  %v195 = vsel %vm176, 0.0, %v186
  %v196 = vsel %vm176, 0.0, %v188
  %vm197 = vcmp.ge.s32.totalorder %v39, 31
  %198 = vrot.lane.b32.xlu0 %v172, 127
  %v199 = vpop.permute.xlu0 %198
  %200 = vrot.lane.b32.xlu0 %v173, 127
  %v201 = vpop.permute.xlu0 %200
  %202 = vrot.lane.b32.xlu0 %v174, 127
  %v203 = vpop.permute.xlu0 %202
  %204 = vrot.lane.b32.xlu0 %v175, 127
  %v205 = vpop.permute.xlu0 %204
  %v210 = vsel %vm197, 0.0, %v199
  %v211 = vsel %vm197, 0.0, %v201
  %v212 = vsel %vm197, 0.0, %v203
  %v213 = vsel %vm197, 0.0, %v205
  %v214 = vld [vmem:[%s1] sm:$0xff]
  %v215 = vperm.slane %v193, 0
  %v216 = vperm.slane %v194, 0
  %v217 = vperm.slane %v195, 0
  %v218 = vperm.slane %v196, 0
  %220 = vset.pattern.permute.xlu0 0
  %221 = vperm.xlu0 %220, %v214
  %v222 = vpop.permute.xlu0 %221
  %v224 = vmul.f32 %v215, %v222
  %v225 = vmul.f32 %v216, %v222
  %v226 = vmul.f32 %v217, %v222
  %v227 = vmul.f32 %v218, %v222
  %v228 = vadd.f32 %v224, 0.0
  %v229 = vadd.f32 %v225, 0.0
  %v230 = vadd.f32 %v226, 0.0
  %v231 = vadd.f32 %v227, 0.0
  %s232 = scalar_lea.vmem %s1, 8
  %v233 = vld [vmem:[%s232] sm:$0xff]
  %v234 = vperm.slane %v147, 0
  %v235 = vperm.slane %v148, 0
  %v236 = vperm.slane %v149, 0
  %v237 = vperm.slane %v150, 0
  %239 = vset.pattern.permute.xlu0 0
  %240 = vperm.xlu0 %239, %v233
  %v241 = vpop.permute.xlu0 %240
  %v243 = vmul.f32 %v234, %v241
  %v244 = vmul.f32 %v235, %v241
  %v245 = vmul.f32 %v236, %v241
  %v246 = vmul.f32 %v237, %v241
  %v247 = vadd.f32 %v228, %v243
  %v248 = vadd.f32 %v229, %v244
  %v249 = vadd.f32 %v230, %v245
  %v250 = vadd.f32 %v231, %v246
  %s251 = scalar_lea.vmem %s1, 16
  %v252 = vld [vmem:[%s251] sm:$0xff]
  %v253 = vperm.slane %v210, 0
  %v254 = vperm.slane %v211, 0
  %v255 = vperm.slane %v212, 0
  %v256 = vperm.slane %v213, 0
  %258 = vset.pattern.permute.xlu0 0
  %259 = vperm.xlu0 %258, %v252
  %v260 = vpop.permute.xlu0 %259
  %v262 = vmul.f32 %v253, %v260
  %v263 = vmul.f32 %v254, %v260
  %v264 = vmul.f32 %v255, %v260
  %v265 = vmul.f32 %v256, %v260
  %v266 = vadd.f32 %v247, %v262
  %v267 = vadd.f32 %v248, %v263
  %v268 = vadd.f32 %v249, %v264
  %v269 = vadd.f32 %v250, %v265
  %s270 = scalar_lea.vmem %s1, 24
  %v271 = vld [vmem:[%s270] sm:$0xff]
  %v272 = vperm.slane %v193, 1
  %v273 = vperm.slane %v194, 1
  %v274 = vperm.slane %v195, 1
  %v275 = vperm.slane %v196, 1
  %277 = vset.pattern.permute.xlu0 0
  %278 = vperm.xlu0 %277, %v271
  %v279 = vpop.permute.xlu0 %278
  %v281 = vmul.f32 %v272, %v279
  %v282 = vmul.f32 %v273, %v279
  %v283 = vmul.f32 %v274, %v279
  %v284 = vmul.f32 %v275, %v279
  %v285 = vadd.f32 %v266, %v281
  %v286 = vadd.f32 %v267, %v282
  %v287 = vadd.f32 %v268, %v283
  %v288 = vadd.f32 %v269, %v284
  %s289 = scalar_lea.vmem %s1, 32
  %v290 = vld [vmem:[%s289] sm:$0xff]
  %v291 = vperm.slane %v147, 1
  %v292 = vperm.slane %v148, 1
  %v293 = vperm.slane %v149, 1
  %v294 = vperm.slane %v150, 1
  %296 = vset.pattern.permute.xlu0 0
  %297 = vperm.xlu0 %296, %v290
  %v298 = vpop.permute.xlu0 %297
  %v300 = vmul.f32 %v291, %v298
  %v301 = vmul.f32 %v292, %v298
  %v302 = vmul.f32 %v293, %v298
  %v303 = vmul.f32 %v294, %v298
  %v304 = vadd.f32 %v285, %v300
  %v305 = vadd.f32 %v286, %v301
  %v306 = vadd.f32 %v287, %v302
  %v307 = vadd.f32 %v288, %v303
  %s308 = scalar_lea.vmem %s1, 40
  %v309 = vld [vmem:[%s308] sm:$0xff]
  %v310 = vperm.slane %v210, 1
  %v311 = vperm.slane %v211, 1
  %v312 = vperm.slane %v212, 1
  %v313 = vperm.slane %v213, 1
  %315 = vset.pattern.permute.xlu0 0
  %316 = vperm.xlu0 %315, %v309
  %v317 = vpop.permute.xlu0 %316
  %v319 = vmul.f32 %v310, %v317
  %v320 = vmul.f32 %v311, %v317
  %v321 = vmul.f32 %v312, %v317
  %v322 = vmul.f32 %v313, %v317
  %v323 = vadd.f32 %v304, %v319
  %v324 = vadd.f32 %v305, %v320
  %v325 = vadd.f32 %v306, %v321
  %v326 = vadd.f32 %v307, %v322
  %v327 = vld [vmem:[%s2] sm:$0xff]
  %329 = vset.pattern.permute.xlu0 0
  %330 = vperm.xlu0 %329, %v327
  %v331 = vpop.permute.xlu0 %330
  %v333 = vadd.f32 %v323, %v331
  %v334 = vadd.f32 %v324, %v331
  %v335 = vadd.f32 %v325, %v331
  %v336 = vadd.f32 %v326, %v331
  %vm337 = vcmask 261120
  %v338 = vsel %vm337, %v333, 0.0
  %339 = vadd.xlane.f32.xlu0 %v338
  %v340 = vpop.xlane.xlu0 %339
  %v341 = vsel %vm337, %v334, 0.0
  %342 = vadd.xlane.f32.xlu0 %v341
  %v343 = vpop.xlane.xlu0 %342
  %v344 = vsel %vm337, %v335, 0.0
  %345 = vadd.xlane.f32.xlu0 %v344
  %v346 = vpop.xlane.xlu0 %345
  %v347 = vsel %vm337, %v336, 0.0
  %348 = vadd.xlane.f32.xlu0 %v347
  %v349 = vpop.xlane.xlu0 %348
  %v350 = vmul.f32 %v340, %v63
  %v351 = vmul.f32 %v343, %v63
  %v352 = vmul.f32 %v346, %v63
  %v353 = vmul.f32 %v349, %v63
  %v354 = vadd.f32 %v350, %v351
  %v355 = vadd.f32 %v354, %v352
  %v356 = vadd.f32 %v355, %v353
  %v357 = vmul.f32 %v356, %v82
  %v358 = vsub.f32 %v333, %v357
  %v359 = vsub.f32 %v334, %v357
  %v360 = vsub.f32 %v335, %v357
  %v361 = vsub.f32 %v336, %v357
  %v362 = vmul.f32 %v358, %v358
  %v363 = vmul.f32 %v359, %v359
  %v364 = vmul.f32 %v360, %v360
  %v365 = vmul.f32 %v361, %v361
  %v366 = vsel %vm337, %v362, 0.0
  %367 = vadd.xlane.f32.xlu0 %v366
  %v368 = vpop.xlane.xlu0 %367
  %v369 = vsel %vm337, %v363, 0.0
  %370 = vadd.xlane.f32.xlu0 %v369
  %v371 = vpop.xlane.xlu0 %370
  %v372 = vsel %vm337, %v364, 0.0
  %373 = vadd.xlane.f32.xlu0 %v372
  %v374 = vpop.xlane.xlu0 %373
  %v375 = vsel %vm337, %v365, 0.0
  %376 = vadd.xlane.f32.xlu0 %v375
  %v377 = vpop.xlane.xlu0 %376
  %v378 = vmul.f32 %v368, %v63
  %v379 = vmul.f32 %v371, %v63
  %v380 = vmul.f32 %v374, %v63
  %v381 = vmul.f32 %v377, %v63
  %v382 = vadd.f32 %v378, %v379
  %v383 = vadd.f32 %v382, %v380
  %v384 = vadd.f32 %v383, %v381
  %v385 = vmul.f32 %v384, %v82
  %v386 = vadd.f32 %v385, 1e-05
  %v387 = vrsqrt.pop %v386
  %v388 = vmul.f32 %v387, %v386
  %v389 = vmul.f32 %v388, %v387
  %v390 = vmul.f32 0.5, %v389
  %v391 = vsub.f32 1.5, %v390
  %v392 = vmul.f32 %v387, %v391
  %vm393 = vweird.f32 %v386
  %vm394 = vweird.f32 %v387
  %vm395 = vmor %vm393, %vm394
  %v396 = vsel %vm395, %v387, %v392
  %v397 = vmul.f32 %v358, %v396
  %v398 = vmul.f32 %v359, %v396
  %v399 = vmul.f32 %v360, %v396
  %v400 = vmul.f32 %v361, %v396
  %v401 = vld [vmem:[%s5] sm:$0xff]
  %403 = vset.pattern.permute.xlu0 0
  %404 = vperm.xlu0 %403, %v401
  %v405 = vpop.permute.xlu0 %404
  %v407 = vmul.f32 %v397, %v405
  %v408 = vmul.f32 %v398, %v405
  %v409 = vmul.f32 %v399, %v405
  %v410 = vmul.f32 %v400, %v405
  %v411 = vld [vmem:[%s6] sm:$0xff]
  %413 = vset.pattern.permute.xlu0 0
  %414 = vperm.xlu0 %413, %v411
  %v415 = vpop.permute.xlu0 %414
  %v417 = vadd.f32 %v407, %v415
  %v418 = vadd.f32 %v408, %v415
  %v419 = vadd.f32 %v409, %v415
  %v420 = vadd.f32 %v410, %v415
  %v421 = vmax.f32 %v417, 0.0
  %v422 = vmax.f32 %v418, 0.0
  %v423 = vmax.f32 %v419, 0.0
  %v424 = vmax.f32 %v420, 0.0
  %v429 = vrot.slane %v422, 7
  %vm430 = vcmask 1041409
  %v431 = vsel %vm430, %v429, %v421
  %vm432 = vcmask 1045509
  %v433 = vsel %vm432, %v429, %v431
  %v434 = vrot.slane %v423, 6
  %vm435 = vcmask 1042434
  %v436 = vsel %vm435, %v434, %v433
  %vm437 = vcmask 1046534
  %v438 = vsel %vm437, %v434, %v436
  %v439 = vrot.slane %v424, 5
  %vm440 = vcmask 1043459
  %v441 = vsel %vm440, %v439, %v438
  %vm442 = vcmask 1047559
  %v443 = vsel %vm442, %v439, %v441
  %vm445 = vcmask 257024
  %446 = vst.msk [vmem:[#allocation2] sm:$0xf] %vm445, %v443
  %v447 = vrot.slane %v421, 1
  %v448 = vsel %vm430, %v422, %v447
  %v449 = vsel %vm432, %v422, %v448
  %v450 = vrot.slane %v423, 7
  %v451 = vsel %vm435, %v450, %v449
  %v452 = vsel %vm437, %v450, %v451
  %v453 = vrot.slane %v424, 6
  %v454 = vsel %vm440, %v453, %v452
  %v455 = vsel %vm442, %v453, %v454
  %456 = vrot.lane.b32.xlu0 %v455, 32
  %v457 = vpop.permute.xlu0 %456
  %vm459 = vcmask 519424
  %460 = vst.msk [vmem:[#allocation2] sm:$0xf] %vm459, %v457
  %v461 = vrot.slane %v421, 2
  %v462 = vrot.slane %v422, 1
  %v463 = vsel %vm430, %v462, %v461
  %v464 = vsel %vm432, %v462, %v463
  %v465 = vsel %vm435, %v423, %v464
  %v466 = vsel %vm437, %v423, %v465
  %v467 = vrot.slane %v424, 7
  %v468 = vsel %vm440, %v467, %v466
  %v469 = vsel %vm442, %v467, %v468
  %470 = vrot.lane.b32.xlu0 %v469, 64
  %v471 = vpop.permute.xlu0 %470
  %vm473 = vcmask 781824
  %474 = vst.msk [vmem:[#allocation2] sm:$0xf] %vm473, %v471
  %v475 = vrot.slane %v421, 3
  %v476 = vrot.slane %v422, 2
  %v477 = vsel %vm430, %v476, %v475
  %v478 = vsel %vm432, %v476, %v477
  %v479 = vrot.slane %v423, 1
  %v480 = vsel %vm435, %v479, %v478
  %v481 = vsel %vm437, %v479, %v480
  %v482 = vsel %vm440, %v424, %v481
  %v483 = vsel %vm442, %v424, %v482
  %484 = vrot.lane.b32.xlu0 %v483, 96
  %v485 = vpop.permute.xlu0 %484
  %vm487 = vcmask 1044224
  %488 = vst.msk [vmem:[#allocation2] sm:$0xf] %vm487, %v485
  %489 = vst.sshfl [vmem:[#allocation1] sm:$0xff pattern:$0x75316420] %v421
  %s490 = scalar_lea.vmem [#allocation1], 1
  %v491 = vld [vmem:[%s490] ss:$2 sm:$0xff]
  %492 = vst.sshfl [vmem:[#allocation1 + $0x10] sm:$0xff pattern:$0x75316420] %v422
  %s493 = scalar_lea.vmem [#allocation1], 17
  %v494 = vld [vmem:[%s493] ss:$2 sm:$0xff]
  %495 = vst.sshfl [vmem:[#allocation1 + $0x20] sm:$0xff pattern:$0x75316420] %v423
  %s496 = scalar_lea.vmem [#allocation1], 33
  %v497 = vld [vmem:[%s496] ss:$2 sm:$0xff]
  %498 = vst.sshfl [vmem:[#allocation1 + $0x30] sm:$0xff pattern:$0x75316420] %v424
  %s499 = scalar_lea.vmem [#allocation1], 49
  %v500 = vld [vmem:[%s499] ss:$2 sm:$0xff]
  %v501 = vrot.slane %v494, 7
  %v502 = vsel %vm430, %v501, %v491
  %v503 = vsel %vm432, %v501, %v502
  %v504 = vrot.slane %v497, 6
  %v505 = vsel %vm435, %v504, %v503
  %v506 = vsel %vm437, %v504, %v505
  %v507 = vrot.slane %v500, 5
  %v508 = vsel %vm440, %v507, %v506
  %v509 = vsel %vm442, %v507, %v508
  %511 = vst.msk [vmem:[#allocation2 + $0x4] sm:$0xf] %vm445, %v509
  %512 = vst.sshfl [vmem:[#allocation1] sm:$0xff pattern:$0x75316420] %v421
  %s513 = scalar_lea.vmem [#allocation1], 1
  %v514 = vld [vmem:[%s513] ss:$2 sm:$0xff]
  %515 = vst.sshfl [vmem:[#allocation1 + $0x10] sm:$0xff pattern:$0x75316420] %v422
  %s516 = scalar_lea.vmem [#allocation1], 17
  %v517 = vld [vmem:[%s516] ss:$2 sm:$0xff]
  %518 = vst.sshfl [vmem:[#allocation1 + $0x20] sm:$0xff pattern:$0x75316420] %v423
  %s519 = scalar_lea.vmem [#allocation1], 33
  %v520 = vld [vmem:[%s519] ss:$2 sm:$0xff]
  %521 = vst.sshfl [vmem:[#allocation1 + $0x30] sm:$0xff pattern:$0x75316420] %v424
  %s522 = scalar_lea.vmem [#allocation1], 49
  %v523 = vld [vmem:[%s522] ss:$2 sm:$0xff]
  %v524 = vrot.slane %v514, 1
  %v525 = vsel %vm430, %v517, %v524
  %v526 = vsel %vm432, %v517, %v525
  %v527 = vrot.slane %v520, 7
  %v528 = vsel %vm435, %v527, %v526
  %v529 = vsel %vm437, %v527, %v528
  %v530 = vrot.slane %v523, 6
  %v531 = vsel %vm440, %v530, %v529
  %v532 = vsel %vm442, %v530, %v531
  %533 = vrot.lane.b32.xlu0 %v532, 32
  %v534 = vpop.permute.xlu0 %533
  %536 = vst.msk [vmem:[#allocation2 + $0x4] sm:$0xf] %vm459, %v534
  %537 = vst.sshfl [vmem:[#allocation1] sm:$0xff pattern:$0x75316420] %v421
  %s538 = scalar_lea.vmem [#allocation1], 1
  %v539 = vld [vmem:[%s538] ss:$2 sm:$0xff]
  %540 = vst.sshfl [vmem:[#allocation1 + $0x10] sm:$0xff pattern:$0x75316420] %v422
  %s541 = scalar_lea.vmem [#allocation1], 17
  %v542 = vld [vmem:[%s541] ss:$2 sm:$0xff]
  %543 = vst.sshfl [vmem:[#allocation1 + $0x20] sm:$0xff pattern:$0x75316420] %v423
  %s544 = scalar_lea.vmem [#allocation1], 33
  %v545 = vld [vmem:[%s544] ss:$2 sm:$0xff]
  %546 = vst.sshfl [vmem:[#allocation1 + $0x30] sm:$0xff pattern:$0x75316420] %v424
  %s547 = scalar_lea.vmem [#allocation1], 49
  %v548 = vld [vmem:[%s547] ss:$2 sm:$0xff]
  %v549 = vrot.slane %v539, 2
  %v550 = vrot.slane %v542, 1
  %v551 = vsel %vm430, %v550, %v549
  %v552 = vsel %vm432, %v550, %v551
  %v553 = vsel %vm435, %v545, %v552
  %v554 = vsel %vm437, %v545, %v553
  %v555 = vrot.slane %v548, 7
  %v556 = vsel %vm440, %v555, %v554
  %v557 = vsel %vm442, %v555, %v556
  %558 = vrot.lane.b32.xlu0 %v557, 64
  %v559 = vpop.permute.xlu0 %558
  %561 = vst.msk [vmem:[#allocation2 + $0x4] sm:$0xf] %vm473, %v559
  %562 = vst.sshfl [vmem:[#allocation1] sm:$0xff pattern:$0x75316420] %v421
  %s563 = scalar_lea.vmem [#allocation1], 1
  %v564 = vld [vmem:[%s563] ss:$2 sm:$0xff]
  %565 = vst.sshfl [vmem:[#allocation1 + $0x10] sm:$0xff pattern:$0x75316420] %v422
  %s566 = scalar_lea.vmem [#allocation1], 17
  %v567 = vld [vmem:[%s566] ss:$2 sm:$0xff]
  %568 = vst.sshfl [vmem:[#allocation1 + $0x20] sm:$0xff pattern:$0x75316420] %v423
  %s569 = scalar_lea.vmem [#allocation1], 33
  %v570 = vld [vmem:[%s569] ss:$2 sm:$0xff]
  %571 = vst.sshfl [vmem:[#allocation1 + $0x30] sm:$0xff pattern:$0x75316420] %v424
  %s572 = scalar_lea.vmem [#allocation1], 49
  %v573 = vld [vmem:[%s572] ss:$2 sm:$0xff]
  %v574 = vrot.slane %v564, 3
  %v575 = vrot.slane %v567, 2
  %v576 = vsel %vm430, %v575, %v574
  %v577 = vsel %vm432, %v575, %v576
  %v578 = vrot.slane %v570, 1
  %v579 = vsel %vm435, %v578, %v577
  %v580 = vsel %vm437, %v578, %v579
  %v581 = vsel %vm440, %v573, %v580
  %v582 = vsel %vm442, %v573, %v581
  %583 = vrot.lane.b32.xlu0 %v582, 96
  %v584 = vpop.permute.xlu0 %583
  %586 = vst.msk [vmem:[#allocation2 + $0x4] sm:$0xf] %vm487, %v584
  %s587 = scalar_lea.vmem %s0, 8
  %v588 = vld [vmem:[%s587] sm:$0x3]
  %v589 = vld [vmem:[%s587 + $0x2] sm:$0x3]
  %v590 = vld [vmem:[%s587 + $0x4] sm:$0x3]
  %v591 = vld [vmem:[%s587 + $0x6] sm:$0x3]
  %v592 = vsel %vm44, %v588, 0.0
  %593 = vadd.xlane.f32.xlu0 %v592
  %v594 = vpop.xlane.xlu0 %593
  %v595 = vsel %vm44, %v589, 0.0
  %596 = vadd.xlane.f32.xlu0 %v595
  %v597 = vpop.xlane.xlu0 %596
  %v598 = vsel %vm44, %v590, 0.0
  %599 = vadd.xlane.f32.xlu0 %v598
  %v600 = vpop.xlane.xlu0 %599
  %v601 = vsel %vm44, %v591, 0.0
  %602 = vadd.xlane.f32.xlu0 %v601
  %v603 = vpop.xlane.xlu0 %602
  %v604 = vmul.f32 %v594, %v63
  %v605 = vmul.f32 %v597, %v63
  %v606 = vmul.f32 %v600, %v63
  %v607 = vmul.f32 %v603, %v63
  %v608 = vsel %vm68, %v604, 0.0
  %v609 = vsel %vm68, %v605, 0.0
  %v610 = vadd.f32 %v608, %v609
  %v611 = vsel %vm68, %v606, 0.0
  %v612 = vadd.f32 %v610, %v611
  %v613 = vsel %vm68, %v607, 0.0
  %v614 = vadd.f32 %v612, %v613
  %v615 = vmul.f32 %v614, %v82
  %v616 = vsub.f32 %v588, %v615
  %v617 = vsub.f32 %v589, %v615
  %v618 = vsub.f32 %v590, %v615
  %v619 = vsub.f32 %v591, %v615
  %v620 = vmul.f32 %v616, %v616
  %v621 = vmul.f32 %v617, %v617
  %v622 = vmul.f32 %v618, %v618
  %v623 = vmul.f32 %v619, %v619
  %v624 = vsel %vm44, %v620, 0.0
  %625 = vadd.xlane.f32.xlu0 %v624
  %v626 = vpop.xlane.xlu0 %625
  %v627 = vsel %vm44, %v621, 0.0
  %628 = vadd.xlane.f32.xlu0 %v627
  %v629 = vpop.xlane.xlu0 %628
  %v630 = vsel %vm44, %v622, 0.0
  %631 = vadd.xlane.f32.xlu0 %v630
  %v632 = vpop.xlane.xlu0 %631
  %v633 = vsel %vm44, %v623, 0.0
  %634 = vadd.xlane.f32.xlu0 %v633
  %v635 = vpop.xlane.xlu0 %634
  %v636 = vmul.f32 %v626, %v63
  %v637 = vmul.f32 %v629, %v63
  %v638 = vmul.f32 %v632, %v63
  %v639 = vmul.f32 %v635, %v63
  %v640 = vsel %vm68, %v636, 0.0
  %v641 = vsel %vm68, %v637, 0.0
  %v642 = vadd.f32 %v640, %v641
  %v643 = vsel %vm68, %v638, 0.0
  %v644 = vadd.f32 %v642, %v643
  %v645 = vsel %vm68, %v639, 0.0
  %v646 = vadd.f32 %v644, %v645
  %v647 = vmul.f32 %v646, %v82
  %v648 = vadd.f32 %v647, 1e-05
  %v649 = vrsqrt.pop %v648
  %v650 = vmul.f32 %v649, %v648
  %v651 = vmul.f32 %v650, %v649
  %v652 = vmul.f32 0.5, %v651
  %v653 = vsub.f32 1.5, %v652
  %v654 = vmul.f32 %v649, %v653
  %vm655 = vweird.f32 %v648
  %vm656 = vweird.f32 %v649
  %vm657 = vmor %vm655, %vm656
  %v658 = vsel %vm657, %v649, %v654
  %v659 = vmul.f32 %v616, %v658
  %v660 = vmul.f32 %v617, %v658
  %v661 = vmul.f32 %v618, %v658
  %v662 = vmul.f32 %v619, %v658
  %s663 = scalar_lea.vmem %s3, 2
  %v664 = vld [vmem:[%s663] sm:$0x3]
  %666 = vset.pattern.permute.xlu0 0
  %667 = vperm.xlu0 %666, %v664
  %v668 = vpop.permute.xlu0 %667
  %v670 = vmul.f32 %v659, %v668
  %v671 = vmul.f32 %v660, %v668
  %v672 = vmul.f32 %v661, %v668
  %v673 = vmul.f32 %v662, %v668
  %s674 = scalar_lea.vmem %s4, 2
  %v675 = vld [vmem:[%s674] sm:$0x3]
  %677 = vset.pattern.permute.xlu0 0
  %678 = vperm.xlu0 %677, %v675
  %v679 = vpop.permute.xlu0 %678
  %v681 = vadd.f32 %v670, %v679
  %v682 = vadd.f32 %v671, %v679
  %v683 = vadd.f32 %v672, %v679
  %v684 = vadd.f32 %v673, %v679
  %685 = vrot.lane.b32.xlu0 %v681, 32
  %v686 = vpop.permute.xlu0 %685
  %v687 = vsel %vm151, %v686, %v681
  %688 = vrot.lane.b32.xlu0 %v682, 32
  %v689 = vpop.permute.xlu0 %688
  %v690 = vsel %vm151, %v689, %v682
  %691 = vrot.lane.b32.xlu0 %v683, 32
  %v692 = vpop.permute.xlu0 %691
  %v693 = vsel %vm151, %v692, %v683
  %694 = vrot.lane.b32.xlu0 %v684, 32
  %v695 = vpop.permute.xlu0 %694
  %v696 = vsel %vm151, %v695, %v684
  %697 = vrot.lane.b32.xlu0 %v687, 32
  %v698 = vpop.permute.xlu0 %697
  %699 = vrot.lane.b32.xlu0 %v690, 32
  %v700 = vpop.permute.xlu0 %699
  %701 = vrot.lane.b32.xlu0 %v693, 32
  %v702 = vpop.permute.xlu0 %701
  %703 = vrot.lane.b32.xlu0 %v696, 32
  %v704 = vpop.permute.xlu0 %703
  %v705 = vsel %vm151, %v698, %v681
  %v706 = vsel %vm151, %v700, %v682
  %v707 = vsel %vm151, %v702, %v683
  %v708 = vsel %vm151, %v704, %v684
  %713 = vrot.lane.b32.xlu0 %v705, 97
  %v714 = vpop.permute.xlu0 %713
  %715 = vrot.lane.b32.xlu0 %v706, 97
  %v716 = vpop.permute.xlu0 %715
  %717 = vrot.lane.b32.xlu0 %v707, 97
  %v718 = vpop.permute.xlu0 %717
  %719 = vrot.lane.b32.xlu0 %v708, 97
  %v720 = vpop.permute.xlu0 %719
  %v725 = vsel %vm176, 0.0, %v714
  %v726 = vsel %vm176, 0.0, %v716
  %v727 = vsel %vm176, 0.0, %v718
  %v728 = vsel %vm176, 0.0, %v720
  %729 = vrot.lane.b32.xlu0 %v705, 127
  %v730 = vpop.permute.xlu0 %729
  %731 = vrot.lane.b32.xlu0 %v706, 127
  %v732 = vpop.permute.xlu0 %731
  %733 = vrot.lane.b32.xlu0 %v707, 127
  %v734 = vpop.permute.xlu0 %733
  %735 = vrot.lane.b32.xlu0 %v708, 127
  %v736 = vpop.permute.xlu0 %735
  %v741 = vsel %vm197, 0.0, %v730
  %v742 = vsel %vm197, 0.0, %v732
  %v743 = vsel %vm197, 0.0, %v734
  %v744 = vsel %vm197, 0.0, %v736
  %s745 = scalar_lea.vmem %s1, 48
  %v746 = vld [vmem:[%s745] sm:$0xff]
  %v747 = vperm.slane %v725, 0
  %v748 = vperm.slane %v726, 0
  %v749 = vperm.slane %v727, 0
  %v750 = vperm.slane %v728, 0
  %752 = vset.pattern.permute.xlu0 0
  %753 = vperm.xlu0 %752, %v746
  %v754 = vpop.permute.xlu0 %753
  %v756 = vmul.f32 %v747, %v754
  %v757 = vmul.f32 %v748, %v754
  %v758 = vmul.f32 %v749, %v754
  %v759 = vmul.f32 %v750, %v754
  %v760 = vadd.f32 %v756, 0.0
  %v761 = vadd.f32 %v757, 0.0
  %v762 = vadd.f32 %v758, 0.0
  %v763 = vadd.f32 %v759, 0.0
  %s764 = scalar_lea.vmem %s1, 56
  %v765 = vld [vmem:[%s764] sm:$0xff]
  %v766 = vperm.slane %v681, 0
  %v767 = vperm.slane %v682, 0
  %v768 = vperm.slane %v683, 0
  %v769 = vperm.slane %v684, 0
  %771 = vset.pattern.permute.xlu0 0
  %772 = vperm.xlu0 %771, %v765
  %v773 = vpop.permute.xlu0 %772
  %v775 = vmul.f32 %v766, %v773
  %v776 = vmul.f32 %v767, %v773
  %v777 = vmul.f32 %v768, %v773
  %v778 = vmul.f32 %v769, %v773
  %v779 = vadd.f32 %v760, %v775
  %v780 = vadd.f32 %v761, %v776
  %v781 = vadd.f32 %v762, %v777
  %v782 = vadd.f32 %v763, %v778
  %s783 = scalar_lea.vmem %s1, 64
  %v784 = vld [vmem:[%s783] sm:$0xff]
  %v785 = vperm.slane %v741, 0
  %v786 = vperm.slane %v742, 0
  %v787 = vperm.slane %v743, 0
  %v788 = vperm.slane %v744, 0
  %790 = vset.pattern.permute.xlu0 0
  %791 = vperm.xlu0 %790, %v784
  %v792 = vpop.permute.xlu0 %791
  %v794 = vmul.f32 %v785, %v792
  %v795 = vmul.f32 %v786, %v792
  %v796 = vmul.f32 %v787, %v792
  %v797 = vmul.f32 %v788, %v792
  %v798 = vadd.f32 %v779, %v794
  %v799 = vadd.f32 %v780, %v795
  %v800 = vadd.f32 %v781, %v796
  %v801 = vadd.f32 %v782, %v797
  %s802 = scalar_lea.vmem %s1, 72
  %v803 = vld [vmem:[%s802] sm:$0xff]
  %v804 = vperm.slane %v725, 1
  %v805 = vperm.slane %v726, 1
  %v806 = vperm.slane %v727, 1
  %v807 = vperm.slane %v728, 1
  %809 = vset.pattern.permute.xlu0 0
  %810 = vperm.xlu0 %809, %v803
  %v811 = vpop.permute.xlu0 %810
  %v813 = vmul.f32 %v804, %v811
  %v814 = vmul.f32 %v805, %v811
  %v815 = vmul.f32 %v806, %v811
  %v816 = vmul.f32 %v807, %v811
  %v817 = vadd.f32 %v798, %v813
  %v818 = vadd.f32 %v799, %v814
  %v819 = vadd.f32 %v800, %v815
  %v820 = vadd.f32 %v801, %v816
  %s821 = scalar_lea.vmem %s1, 80
  %v822 = vld [vmem:[%s821] sm:$0xff]
  %v823 = vperm.slane %v681, 1
  %v824 = vperm.slane %v682, 1
  %v825 = vperm.slane %v683, 1
  %v826 = vperm.slane %v684, 1
  %828 = vset.pattern.permute.xlu0 0
  %829 = vperm.xlu0 %828, %v822
  %v830 = vpop.permute.xlu0 %829
  %v832 = vmul.f32 %v823, %v830
  %v833 = vmul.f32 %v824, %v830
  %v834 = vmul.f32 %v825, %v830
  %v835 = vmul.f32 %v826, %v830
  %v836 = vadd.f32 %v817, %v832
  %v837 = vadd.f32 %v818, %v833
  %v838 = vadd.f32 %v819, %v834
  %v839 = vadd.f32 %v820, %v835
  %s840 = scalar_lea.vmem %s1, 88
  %v841 = vld [vmem:[%s840] sm:$0xff]
  %v842 = vperm.slane %v741, 1
  %v843 = vperm.slane %v742, 1
  %v844 = vperm.slane %v743, 1
  %v845 = vperm.slane %v744, 1
  %847 = vset.pattern.permute.xlu0 0
  %848 = vperm.xlu0 %847, %v841
  %v849 = vpop.permute.xlu0 %848
  %v851 = vmul.f32 %v842, %v849
  %v852 = vmul.f32 %v843, %v849
  %v853 = vmul.f32 %v844, %v849
  %v854 = vmul.f32 %v845, %v849
  %v855 = vadd.f32 %v836, %v851
  %v856 = vadd.f32 %v837, %v852
  %v857 = vadd.f32 %v838, %v853
  %v858 = vadd.f32 %v839, %v854
  %s859 = scalar_lea.vmem %s2, 8
  %v860 = vld [vmem:[%s859] sm:$0xff]
  %862 = vset.pattern.permute.xlu0 0
  %863 = vperm.xlu0 %862, %v860
  %v864 = vpop.permute.xlu0 %863
  %v866 = vadd.f32 %v855, %v864
  %v867 = vadd.f32 %v856, %v864
  %v868 = vadd.f32 %v857, %v864
  %v869 = vadd.f32 %v858, %v864
  %v870 = vsel %vm337, %v866, 0.0
  %871 = vadd.xlane.f32.xlu0 %v870
  %v872 = vpop.xlane.xlu0 %871
  %v873 = vsel %vm337, %v867, 0.0
  %874 = vadd.xlane.f32.xlu0 %v873
  %v875 = vpop.xlane.xlu0 %874
  %v876 = vsel %vm337, %v868, 0.0
  %877 = vadd.xlane.f32.xlu0 %v876
  %v878 = vpop.xlane.xlu0 %877
  %v879 = vsel %vm337, %v869, 0.0
  %880 = vadd.xlane.f32.xlu0 %v879
  %v881 = vpop.xlane.xlu0 %880
  %v882 = vmul.f32 %v872, %v63
  %v883 = vmul.f32 %v875, %v63
  %v884 = vmul.f32 %v878, %v63
  %v885 = vmul.f32 %v881, %v63
  %v886 = vadd.f32 %v882, %v883
  %v887 = vadd.f32 %v886, %v884
  %v888 = vadd.f32 %v887, %v885
  %v889 = vmul.f32 %v888, %v82
  %v890 = vsub.f32 %v866, %v889
  %v891 = vsub.f32 %v867, %v889
  %v892 = vsub.f32 %v868, %v889
  %v893 = vsub.f32 %v869, %v889
  %v894 = vmul.f32 %v890, %v890
  %v895 = vmul.f32 %v891, %v891
  %v896 = vmul.f32 %v892, %v892
  %v897 = vmul.f32 %v893, %v893
  %v898 = vsel %vm337, %v894, 0.0
  %899 = vadd.xlane.f32.xlu0 %v898
  %v900 = vpop.xlane.xlu0 %899
  %v901 = vsel %vm337, %v895, 0.0
  %902 = vadd.xlane.f32.xlu0 %v901
  %v903 = vpop.xlane.xlu0 %902
  %v904 = vsel %vm337, %v896, 0.0
  %905 = vadd.xlane.f32.xlu0 %v904
  %v906 = vpop.xlane.xlu0 %905
  %v907 = vsel %vm337, %v897, 0.0
  %908 = vadd.xlane.f32.xlu0 %v907
  %v909 = vpop.xlane.xlu0 %908
  %v910 = vmul.f32 %v900, %v63
  %v911 = vmul.f32 %v903, %v63
  %v912 = vmul.f32 %v906, %v63
  %v913 = vmul.f32 %v909, %v63
  %v914 = vadd.f32 %v910, %v911
  %v915 = vadd.f32 %v914, %v912
  %v916 = vadd.f32 %v915, %v913
  %v917 = vmul.f32 %v916, %v82
  %v918 = vadd.f32 %v917, 1e-05
  %v919 = vrsqrt.pop %v918
  %v920 = vmul.f32 %v919, %v918
  %v921 = vmul.f32 %v920, %v919
  %v922 = vmul.f32 0.5, %v921
  %v923 = vsub.f32 1.5, %v922
  %v924 = vmul.f32 %v919, %v923
  %vm925 = vweird.f32 %v918
  %vm926 = vweird.f32 %v919
  %vm927 = vmor %vm925, %vm926
  %v928 = vsel %vm927, %v919, %v924
  %v929 = vmul.f32 %v890, %v928
  %v930 = vmul.f32 %v891, %v928
  %v931 = vmul.f32 %v892, %v928
  %v932 = vmul.f32 %v893, %v928
  %s933 = scalar_lea.vmem %s5, 8
  %v934 = vld [vmem:[%s933] sm:$0xff]
  %936 = vset.pattern.permute.xlu0 0
  %937 = vperm.xlu0 %936, %v934
  %v938 = vpop.permute.xlu0 %937
  %v940 = vmul.f32 %v929, %v938
  %v941 = vmul.f32 %v930, %v938
  %v942 = vmul.f32 %v931, %v938
  %v943 = vmul.f32 %v932, %v938
  %s944 = scalar_lea.vmem %s6, 8
  %v945 = vld [vmem:[%s944] sm:$0xff]
  %947 = vset.pattern.permute.xlu0 0
  %948 = vperm.xlu0 %947, %v945
  %v949 = vpop.permute.xlu0 %948
  %v951 = vadd.f32 %v940, %v949
  %v952 = vadd.f32 %v941, %v949
  %v953 = vadd.f32 %v942, %v949
  %v954 = vadd.f32 %v943, %v949
  %v955 = vmax.f32 %v951, 0.0
  %v956 = vmax.f32 %v952, 0.0
  %v957 = vmax.f32 %v953, 0.0
  %v958 = vmax.f32 %v954, 0.0
  %v963 = vrot.slane %v956, 7
  %v964 = vsel %vm430, %v963, %v955
  %v965 = vsel %vm432, %v963, %v964
  %v966 = vrot.slane %v957, 6
  %v967 = vsel %vm435, %v966, %v965
  %v968 = vsel %vm437, %v966, %v967
  %v969 = vrot.slane %v958, 5
  %v970 = vsel %vm440, %v969, %v968
  %v971 = vsel %vm442, %v969, %v970
  %973 = vst.msk [vmem:[#allocation2 + $0x8] sm:$0xf] %vm445, %v971
  %v974 = vrot.slane %v955, 1
  %v975 = vsel %vm430, %v956, %v974
  %v976 = vsel %vm432, %v956, %v975
  %v977 = vrot.slane %v957, 7
  %v978 = vsel %vm435, %v977, %v976
  %v979 = vsel %vm437, %v977, %v978
  %v980 = vrot.slane %v958, 6
  %v981 = vsel %vm440, %v980, %v979
  %v982 = vsel %vm442, %v980, %v981
  %983 = vrot.lane.b32.xlu0 %v982, 32
  %v984 = vpop.permute.xlu0 %983
  %986 = vst.msk [vmem:[#allocation2 + $0x8] sm:$0xf] %vm459, %v984
  %v987 = vrot.slane %v955, 2
  %v988 = vrot.slane %v956, 1
  %v989 = vsel %vm430, %v988, %v987
  %v990 = vsel %vm432, %v988, %v989
  %v991 = vsel %vm435, %v957, %v990
  %v992 = vsel %vm437, %v957, %v991
  %v993 = vrot.slane %v958, 7
  %v994 = vsel %vm440, %v993, %v992
  %v995 = vsel %vm442, %v993, %v994
  %996 = vrot.lane.b32.xlu0 %v995, 64
  %v997 = vpop.permute.xlu0 %996
  %999 = vst.msk [vmem:[#allocation2 + $0x8] sm:$0xf] %vm473, %v997
  %v1000 = vrot.slane %v955, 3
  %v1001 = vrot.slane %v956, 2
  %v1002 = vsel %vm430, %v1001, %v1000
  %v1003 = vsel %vm432, %v1001, %v1002
  %v1004 = vrot.slane %v957, 1
  %v1005 = vsel %vm435, %v1004, %v1003
  %v1006 = vsel %vm437, %v1004, %v1005
  %v1007 = vsel %vm440, %v958, %v1006
  %v1008 = vsel %vm442, %v958, %v1007
  %1009 = vrot.lane.b32.xlu0 %v1008, 96
  %v1010 = vpop.permute.xlu0 %1009
  %1012 = vst.msk [vmem:[#allocation2 + $0x8] sm:$0xf] %vm487, %v1010
  %1013 = vst.sshfl [vmem:[#allocation1] sm:$0xff pattern:$0x75316420] %v955
  %s1014 = scalar_lea.vmem [#allocation1], 1
  %v1015 = vld [vmem:[%s1014] ss:$2 sm:$0xff]
  %1016 = vst.sshfl [vmem:[#allocation1 + $0x10] sm:$0xff pattern:$0x75316420] %v956
  %s1017 = scalar_lea.vmem [#allocation1], 17
  %v1018 = vld [vmem:[%s1017] ss:$2 sm:$0xff]
  %1019 = vst.sshfl [vmem:[#allocation1 + $0x20] sm:$0xff pattern:$0x75316420] %v957
  %s1020 = scalar_lea.vmem [#allocation1], 33
  %v1021 = vld [vmem:[%s1020] ss:$2 sm:$0xff]
  %1022 = vst.sshfl [vmem:[#allocation1 + $0x30] sm:$0xff pattern:$0x75316420] %v958
  %s1023 = scalar_lea.vmem [#allocation1], 49
  %v1024 = vld [vmem:[%s1023] ss:$2 sm:$0xff]
  %v1025 = vrot.slane %v1018, 7
  %v1026 = vsel %vm430, %v1025, %v1015
  %v1027 = vsel %vm432, %v1025, %v1026
  %v1028 = vrot.slane %v1021, 6
  %v1029 = vsel %vm435, %v1028, %v1027
  %v1030 = vsel %vm437, %v1028, %v1029
  %v1031 = vrot.slane %v1024, 5
  %v1032 = vsel %vm440, %v1031, %v1030
  %v1033 = vsel %vm442, %v1031, %v1032
  %1035 = vst.msk [vmem:[#allocation2 + $0xc] sm:$0xf] %vm445, %v1033
  %1036 = vst.sshfl [vmem:[#allocation1] sm:$0xff pattern:$0x75316420] %v955
  %s1037 = scalar_lea.vmem [#allocation1], 1
  %v1038 = vld [vmem:[%s1037] ss:$2 sm:$0xff]
  %1039 = vst.sshfl [vmem:[#allocation1 + $0x10] sm:$0xff pattern:$0x75316420] %v956
  %s1040 = scalar_lea.vmem [#allocation1], 17
  %v1041 = vld [vmem:[%s1040] ss:$2 sm:$0xff]
  %1042 = vst.sshfl [vmem:[#allocation1 + $0x20] sm:$0xff pattern:$0x75316420] %v957
  %s1043 = scalar_lea.vmem [#allocation1], 33
  %v1044 = vld [vmem:[%s1043] ss:$2 sm:$0xff]
  %1045 = vst.sshfl [vmem:[#allocation1 + $0x30] sm:$0xff pattern:$0x75316420] %v958
  %s1046 = scalar_lea.vmem [#allocation1], 49
  %v1047 = vld [vmem:[%s1046] ss:$2 sm:$0xff]
  %v1048 = vrot.slane %v1038, 1
  %v1049 = vsel %vm430, %v1041, %v1048
  %v1050 = vsel %vm432, %v1041, %v1049
  %v1051 = vrot.slane %v1044, 7
  %v1052 = vsel %vm435, %v1051, %v1050
  %v1053 = vsel %vm437, %v1051, %v1052
  %v1054 = vrot.slane %v1047, 6
  %v1055 = vsel %vm440, %v1054, %v1053
  %v1056 = vsel %vm442, %v1054, %v1055
  %1057 = vrot.lane.b32.xlu0 %v1056, 32
  %v1058 = vpop.permute.xlu0 %1057
  %1060 = vst.msk [vmem:[#allocation2 + $0xc] sm:$0xf] %vm459, %v1058
  %1061 = vst.sshfl [vmem:[#allocation1] sm:$0xff pattern:$0x75316420] %v955
  %s1062 = scalar_lea.vmem [#allocation1], 1
  %v1063 = vld [vmem:[%s1062] ss:$2 sm:$0xff]
  %1064 = vst.sshfl [vmem:[#allocation1 + $0x10] sm:$0xff pattern:$0x75316420] %v956
  %s1065 = scalar_lea.vmem [#allocation1], 17
  %v1066 = vld [vmem:[%s1065] ss:$2 sm:$0xff]
  %1067 = vst.sshfl [vmem:[#allocation1 + $0x20] sm:$0xff pattern:$0x75316420] %v957
  %s1068 = scalar_lea.vmem [#allocation1], 33
  %v1069 = vld [vmem:[%s1068] ss:$2 sm:$0xff]
  %1070 = vst.sshfl [vmem:[#allocation1 + $0x30] sm:$0xff pattern:$0x75316420] %v958
  %s1071 = scalar_lea.vmem [#allocation1], 49
  %v1072 = vld [vmem:[%s1071] ss:$2 sm:$0xff]
  %v1073 = vrot.slane %v1063, 2
  %v1074 = vrot.slane %v1066, 1
  %v1075 = vsel %vm430, %v1074, %v1073
  %v1076 = vsel %vm432, %v1074, %v1075
  %v1077 = vsel %vm435, %v1069, %v1076
  %v1078 = vsel %vm437, %v1069, %v1077
  %v1079 = vrot.slane %v1072, 7
  %v1080 = vsel %vm440, %v1079, %v1078
  %v1081 = vsel %vm442, %v1079, %v1080
  %1082 = vrot.lane.b32.xlu0 %v1081, 64
  %v1083 = vpop.permute.xlu0 %1082
  %1085 = vst.msk [vmem:[#allocation2 + $0xc] sm:$0xf] %vm473, %v1083
  %1086 = vst.sshfl [vmem:[#allocation1] sm:$0xff pattern:$0x75316420] %v955
  %s1087 = scalar_lea.vmem [#allocation1], 1
  %v1088 = vld [vmem:[%s1087] ss:$2 sm:$0xff]
  %1089 = vst.sshfl [vmem:[#allocation1 + $0x10] sm:$0xff pattern:$0x75316420] %v956
  %s1090 = scalar_lea.vmem [#allocation1], 17
  %v1091 = vld [vmem:[%s1090] ss:$2 sm:$0xff]
  %1092 = vst.sshfl [vmem:[#allocation1 + $0x20] sm:$0xff pattern:$0x75316420] %v957
  %s1093 = scalar_lea.vmem [#allocation1], 33
  %v1094 = vld [vmem:[%s1093] ss:$2 sm:$0xff]
  %1095 = vst.sshfl [vmem:[#allocation1 + $0x30] sm:$0xff pattern:$0x75316420] %v958
  %s1096 = scalar_lea.vmem [#allocation1], 49
  %v1097 = vld [vmem:[%s1096] ss:$2 sm:$0xff]
  %v1098 = vrot.slane %v1088, 3
  %v1099 = vrot.slane %v1091, 2
  %v1100 = vsel %vm430, %v1099, %v1098
  %v1101 = vsel %vm432, %v1099, %v1100
  %v1102 = vrot.slane %v1094, 1
  %v1103 = vsel %vm435, %v1102, %v1101
  %v1104 = vsel %vm437, %v1102, %v1103
  %v1105 = vsel %vm440, %v1097, %v1104
  %v1106 = vsel %vm442, %v1097, %v1105
  %1107 = vrot.lane.b32.xlu0 %v1106, 96
  %v1108 = vpop.permute.xlu0 %1107
  %1110 = vst.msk [vmem:[#allocation2 + $0xc] sm:$0xf] %vm487, %v1108
  %v1111 = vld [vmem:[#allocation2] sm:$0xff]
  %v1112 = vld [vmem:[#allocation2 + $0x8] sm:$0xff]
  %v1113 = vld [vmem:[%s7] sm:$0xf]
  %v1114 = vld [vmem:[%s7 + $0x4] sm:$0xf]
  %v1115 = vld [vmem:[%s7 + $0x8] sm:$0xf]
  %v1116 = vld [vmem:[%s7 + $0xc] sm:$0xf]
  %v1117 = vld [vmem:[%s7 + $0x10] sm:$0xf]
  %v1118 = vld [vmem:[%s7 + $0x14] sm:$0xf]
  %v1119 = vld [vmem:[%s7 + $0x18] sm:$0xf]
  %v1120 = vld [vmem:[%s7 + $0x1c] sm:$0xf]
  %v1121 = vld [vmem:[%s7 + $0x20] sm:$0xf]
  %v1122 = vld [vmem:[%s7 + $0x24] sm:$0xf]
  %v1123 = vld [vmem:[%s7 + $0x28] sm:$0xf]
  %v1124 = vld [vmem:[%s7 + $0x2c] sm:$0xf]
  %v1125 = vld [vmem:[%s7 + $0x30] sm:$0xf]
  %v1126 = vld [vmem:[%s7 + $0x34] sm:$0xf]
  %v1127 = vld [vmem:[%s7 + $0x38] sm:$0xf]
  %v1128 = vld [vmem:[%s7 + $0x3c] sm:$0xf]
  %v1129 = vld [vmem:[%s7 + $0x40] sm:$0xf]
  %v1130 = vld [vmem:[%s7 + $0x44] sm:$0xf]
  %v1131 = vld [vmem:[%s7 + $0x48] sm:$0xf]
  %v1132 = vld [vmem:[%s7 + $0x4c] sm:$0xf]
  %v1133 = vld [vmem:[%s7 + $0x50] sm:$0xf]
  %v1134 = vld [vmem:[%s7 + $0x54] sm:$0xf]
  %v1135 = vld [vmem:[%s7 + $0x58] sm:$0xf]
  %v1136 = vld [vmem:[%s7 + $0x5c] sm:$0xf]
  %v1137 = vld [vmem:[%s7 + $0x60] sm:$0xf]
  %v1138 = vld [vmem:[%s7 + $0x64] sm:$0xf]
  %v1139 = vld [vmem:[%s7 + $0x68] sm:$0xf]
  %v1140 = vld [vmem:[%s7 + $0x6c] sm:$0xf]
  %v1141 = vld [vmem:[%s7 + $0x70] sm:$0xf]
  %v1142 = vld [vmem:[%s7 + $0x74] sm:$0xf]
  %v1143 = vld [vmem:[%s7 + $0x78] sm:$0xf]
  %v1144 = vld [vmem:[%s7 + $0x7c] sm:$0xf]
  %v1145 = vld [vmem:[%s7 + $0x80] sm:$0xf]
  %v1146 = vld [vmem:[%s7 + $0x84] sm:$0xf]
  %v1147 = vld [vmem:[%s7 + $0x88] sm:$0xf]
  %v1148 = vld [vmem:[%s7 + $0x8c] sm:$0xf]
  %v1149 = vld [vmem:[%s7 + $0x90] sm:$0xf]
  %v1150 = vld [vmem:[%s7 + $0x94] sm:$0xf]
  %v1151 = vld [vmem:[%s7 + $0x98] sm:$0xf]
  %v1152 = vld [vmem:[%s7 + $0x9c] sm:$0xf]
  %v1153 = vld [vmem:[%s7 + $0xa0] sm:$0xf]
  %v1154 = vld [vmem:[%s7 + $0xa4] sm:$0xf]
  %v1155 = vld [vmem:[%s7 + $0xa8] sm:$0xf]
  %v1156 = vld [vmem:[%s7 + $0xac] sm:$0xf]
  %v1157 = vld [vmem:[%s7 + $0xb0] sm:$0xf]
  %v1158 = vld [vmem:[%s7 + $0xb4] sm:$0xf]
  %v1159 = vld [vmem:[%s7 + $0xb8] sm:$0xf]
  %v1160 = vld [vmem:[%s7 + $0xbc] sm:$0xf]
  %v1161 = vld [vmem:[%s7 + $0xc0] sm:$0xf]
  %v1162 = vld [vmem:[%s7 + $0xc4] sm:$0xf]
  %v1163 = vld [vmem:[%s7 + $0xc8] sm:$0xf]
  %v1164 = vld [vmem:[%s7 + $0xcc] sm:$0xf]
  %v1165 = vld [vmem:[%s7 + $0xd0] sm:$0xf]
  %v1166 = vld [vmem:[%s7 + $0xd4] sm:$0xf]
  %v1167 = vld [vmem:[%s7 + $0xd8] sm:$0xf]
  %v1168 = vld [vmem:[%s7 + $0xdc] sm:$0xf]
  %v1169 = vld [vmem:[%s7 + $0xe0] sm:$0xf]
  %v1170 = vld [vmem:[%s7 + $0xe4] sm:$0xf]
  %v1171 = vld [vmem:[%s7 + $0xe8] sm:$0xf]
  %v1172 = vld [vmem:[%s7 + $0xec] sm:$0xf]
  %v1173 = vld [vmem:[%s7 + $0xf0] sm:$0xf]
  %v1174 = vld [vmem:[%s7 + $0xf4] sm:$0xf]
  %v1175 = vld [vmem:[%s7 + $0xf8] sm:$0xf]
  %v1176 = vld [vmem:[%s7 + $0xfc] sm:$0xf]
  %v1177 = vunpack.c.l.bf16 %v1113
  %v1178 = vunpack.c.l.bf16 %v1114
  %v1179 = vunpack.c.l.bf16 %v1115
  %v1180 = vunpack.c.l.bf16 %v1116
  %v1181 = vunpack.c.l.bf16 %v1117
  %v1182 = vunpack.c.l.bf16 %v1118
  %v1183 = vunpack.c.l.bf16 %v1119
  %v1184 = vunpack.c.l.bf16 %v1120
  %v1185 = vunpack.c.l.bf16 %v1121
  %v1186 = vunpack.c.l.bf16 %v1122
  %v1187 = vunpack.c.l.bf16 %v1123
  %v1188 = vunpack.c.l.bf16 %v1124
  %v1189 = vunpack.c.l.bf16 %v1125
  %v1190 = vunpack.c.l.bf16 %v1126
  %v1191 = vunpack.c.l.bf16 %v1127
  %v1192 = vunpack.c.l.bf16 %v1128
  %v1193 = vunpack.c.l.bf16 %v1129
  %v1194 = vunpack.c.l.bf16 %v1130
  %v1195 = vunpack.c.l.bf16 %v1131
  %v1196 = vunpack.c.l.bf16 %v1132
  %v1197 = vunpack.c.l.bf16 %v1133
  %v1198 = vunpack.c.l.bf16 %v1134
  %v1199 = vunpack.c.l.bf16 %v1135
  %v1200 = vunpack.c.l.bf16 %v1136
  %v1201 = vunpack.c.l.bf16 %v1137
  %v1202 = vunpack.c.l.bf16 %v1138
  %v1203 = vunpack.c.l.bf16 %v1139
  %v1204 = vunpack.c.l.bf16 %v1140
  %v1205 = vunpack.c.l.bf16 %v1141
  %v1206 = vunpack.c.l.bf16 %v1142
  %v1207 = vunpack.c.l.bf16 %v1143
  %v1208 = vunpack.c.l.bf16 %v1144
  %v1209 = vunpack.c.l.bf16 %v1145
  %v1210 = vunpack.c.l.bf16 %v1146
  %v1211 = vunpack.c.l.bf16 %v1147
  %v1212 = vunpack.c.l.bf16 %v1148
  %v1213 = vunpack.c.l.bf16 %v1149
  %v1214 = vunpack.c.l.bf16 %v1150
  %v1215 = vunpack.c.l.bf16 %v1151
  %v1216 = vunpack.c.l.bf16 %v1152
  %v1217 = vunpack.c.l.bf16 %v1153
  %v1218 = vunpack.c.l.bf16 %v1154
  %v1219 = vunpack.c.l.bf16 %v1155
  %v1220 = vunpack.c.l.bf16 %v1156
  %v1221 = vunpack.c.l.bf16 %v1157
  %v1222 = vunpack.c.l.bf16 %v1158
  %v1223 = vunpack.c.l.bf16 %v1159
  %v1224 = vunpack.c.l.bf16 %v1160
  %v1225 = vunpack.c.l.bf16 %v1161
  %v1226 = vunpack.c.l.bf16 %v1162
  %v1227 = vunpack.c.l.bf16 %v1163
  %v1228 = vunpack.c.l.bf16 %v1164
  %v1229 = vunpack.c.l.bf16 %v1165
  %v1230 = vunpack.c.l.bf16 %v1166
  %v1231 = vunpack.c.l.bf16 %v1167
  %v1232 = vunpack.c.l.bf16 %v1168
  %v1233 = vunpack.c.l.bf16 %v1169
  %v1234 = vunpack.c.l.bf16 %v1170
  %v1235 = vunpack.c.l.bf16 %v1171
  %v1236 = vunpack.c.l.bf16 %v1172
  %v1237 = vunpack.c.l.bf16 %v1173
  %v1238 = vunpack.c.l.bf16 %v1174
  %v1239 = vunpack.c.l.bf16 %v1175
  %v1240 = vunpack.c.l.bf16 %v1176
  %v1241 = vld [vmem:[%s8] sm:$0x1]
  %v1243 = vperm.slane %v1241, 0
  %1247 = vst [vmem:[#allocation1] ss:$2 sm:$0xff] %v1111
  %s1248 = scalar_lea.vmem [#allocation1], 16
  %1249 = vst [vmem:[%s1248] ss:$2 sm:$0xff] %v1112
  %v1250 = vld.sshfl [vmem:[#allocation1] sm:$0xff pattern:$0x75316420]
  %v1251 = vld.sshfl [vmem:[#allocation1 + $0x8] sm:$0xff pattern:$0x75316420]
  %v1252 = vld.sshfl [vmem:[#allocation1 + $0x10] sm:$0xff pattern:$0x75316420]
  %v1253 = vld.sshfl [vmem:[#allocation1 + $0x18] sm:$0xff pattern:$0x75316420]
  %1258 = vmatpush.msra.mxu0 %v1192
  %1259 = vmatpush.msra.mxu0 %v1191
  %1260 = vmatpush.msra.mxu0 %v1190
  %1261 = vmatpush.msra.mxu0 %v1189
  %1262 = vmatpush.msra.mxu0 %v1188
  %1263 = vmatpush.msra.mxu0 %v1187
  %1264 = vmatpush.msra.mxu0 %v1186
  %1265 = vmatpush.msra.mxu0 %v1185
  %1266 = vmatpush.msra.mxu0 %v1184
  %1267 = vmatpush.msra.mxu0 %v1183
  %1268 = vmatpush.msra.mxu0 %v1182
  %1269 = vmatpush.msra.mxu0 %v1181
  %1270 = vmatpush.msra.mxu0 %v1180
  %1271 = vmatpush.msra.mxu0 %v1179
  %1272 = vmatpush.msra.mxu0 %v1178
  %1273 = vmatpush.msra.mxu0 %v1177
  %1274 = vmatmul.f32.gmra.mxu0 %v1250
  %v1275 = vpop.f32.mrf.mxu0
  %v1276 = vadd.f32 %v1243, %v1275
  %1277 = vdwg.mxu0
  %1278 = vmatpush.msra.mxu0 %v1208
  %1279 = vmatpush.msra.mxu0 %v1207
  %1280 = vmatpush.msra.mxu0 %v1206
  %1281 = vmatpush.msra.mxu0 %v1205
  %1282 = vmatpush.msra.mxu0 %v1204
  %1283 = vmatpush.msra.mxu0 %v1203
  %1284 = vmatpush.msra.mxu0 %v1202
  %1285 = vmatpush.msra.mxu0 %v1201
  %1286 = vmatpush.msra.mxu0 %v1200
  %1287 = vmatpush.msra.mxu0 %v1199
  %1288 = vmatpush.msra.mxu0 %v1198
  %1289 = vmatpush.msra.mxu0 %v1197
  %1290 = vmatpush.msra.mxu0 %v1196
  %1291 = vmatpush.msra.mxu0 %v1195
  %1292 = vmatpush.msra.mxu0 %v1194
  %1293 = vmatpush.msra.mxu0 %v1193
  %1294 = vmatmul.f32.gmra.mxu0 %v1251
  %v1295 = vpop.f32.mrf.mxu0
  %v1296 = vadd.f32 %v1276, %v1295
  %1297 = vdwg.mxu0
  %1298 = vmatpush.msra.mxu0 %v1224
  %1299 = vmatpush.msra.mxu0 %v1223
  %1300 = vmatpush.msra.mxu0 %v1222
  %1301 = vmatpush.msra.mxu0 %v1221
  %1302 = vmatpush.msra.mxu0 %v1220
  %1303 = vmatpush.msra.mxu0 %v1219
  %1304 = vmatpush.msra.mxu0 %v1218
  %1305 = vmatpush.msra.mxu0 %v1217
  %1306 = vmatpush.msra.mxu0 %v1216
  %1307 = vmatpush.msra.mxu0 %v1215
  %1308 = vmatpush.msra.mxu0 %v1214
  %1309 = vmatpush.msra.mxu0 %v1213
  %1310 = vmatpush.msra.mxu0 %v1212
  %1311 = vmatpush.msra.mxu0 %v1211
  %1312 = vmatpush.msra.mxu0 %v1210
  %1313 = vmatpush.msra.mxu0 %v1209
  %1314 = vmatmul.f32.gmra.mxu0 %v1252
  %v1315 = vpop.f32.mrf.mxu0
  %v1316 = vadd.f32 %v1296, %v1315
  %1317 = vdwg.mxu0
  %1318 = vmatpush.msra.mxu0 %v1240
  %1319 = vmatpush.msra.mxu0 %v1239
  %1320 = vmatpush.msra.mxu0 %v1238
  %1321 = vmatpush.msra.mxu0 %v1237
  %1322 = vmatpush.msra.mxu0 %v1236
  %1323 = vmatpush.msra.mxu0 %v1235
  %1324 = vmatpush.msra.mxu0 %v1234
  %1325 = vmatpush.msra.mxu0 %v1233
  %1326 = vmatpush.msra.mxu0 %v1232
  %1327 = vmatpush.msra.mxu0 %v1231
  %1328 = vmatpush.msra.mxu0 %v1230
  %1329 = vmatpush.msra.mxu0 %v1229
  %1330 = vmatpush.msra.mxu0 %v1228
  %1331 = vmatpush.msra.mxu0 %v1227
  %1332 = vmatpush.msra.mxu0 %v1226
  %1333 = vmatpush.msra.mxu0 %v1225
  %1334 = vmatmul.f32.gmra.mxu0 %v1253
  %v1335 = vpop.f32.mrf.mxu0
  %v1336 = vadd.f32 %v1316, %v1335
  %1337 = vdwg.mxu0
  %vm1338 = vcmask 519168
  %v1339 = vsel %vm1338, %v1336, 0.0
  %v1340 = vrot.slane %v1339, 4
  %v1341 = vadd.f32 %v1339, %v1340
  %v1342 = vrot.slane %v1341, 2
  %v1343 = vadd.f32 %v1341, %v1342
  %v1344 = vrot.slane %v1343, 1
  %v1345 = vadd.f32 %v1343, %v1344
  %v1346 = vmul.f32 %v1345, %v82
  %v1347 = vsub.f32 %v1336, %v1346
  %v1348 = vmul.f32 %v1347, %v1347
  %v1349 = vsel %vm1338, %v1348, 0.0
  %v1350 = vrot.slane %v1349, 4
  %v1351 = vadd.f32 %v1349, %v1350
  %v1352 = vrot.slane %v1351, 2
  %v1353 = vadd.f32 %v1351, %v1352
  %v1354 = vrot.slane %v1353, 1
  %v1355 = vadd.f32 %v1353, %v1354
  %v1356 = vmul.f32 %v1355, %v82
  %v1357 = vadd.f32 %v1356, 1e-05
  %v1358 = vrsqrt.pop %v1357
  %v1359 = vmul.f32 %v1358, %v1357
  %v1360 = vmul.f32 %v1359, %v1358
  %v1361 = vmul.f32 0.5, %v1360
  %v1362 = vsub.f32 1.5, %v1361
  %v1363 = vmul.f32 %v1358, %v1362
  %vm1364 = vweird.f32 %v1357
  %vm1365 = vweird.f32 %v1358
  %vm1366 = vmor %vm1364, %vm1365
  %v1367 = vsel %vm1366, %v1358, %v1363
  %v1368 = vmul.f32 %v1347, %v1367
  %v1369 = vld [vmem:[%s9] sm:$0x1]
  %v1371 = vperm.slane %v1369, 0
  %v1373 = vmul.f32 %v1368, %v1371
  %v1374 = vld [vmem:[%s10] sm:$0x1]
  %v1376 = vperm.slane %v1374, 0
  %v1378 = vadd.f32 %v1373, %v1376
  %v1379 = vmax.f32 %v1378, 0.0
  %v1380 = vpack.c.bf16 %v1379, %v1379
  %vm1381 = vcmask 517120
  %1382 = vst.msk [vmem:[%s11] sm:$0x3] %vm1381, %v1380
  // Predicated region
  $region46: #{convtranse2_forward.2} parent=0 // pred_check
    _
  $region47: #{convtranse2_forward.2} parent=0 // pred_check_branch
    %1384 = sbr.rel (0) target = $region49
  $region48: #{convtranse2_forward.2} parent=0 // pred_region
    _
  $region49: #{convtranse2_forward.2} parent=0 // pred_fallthru
    _
  // Predicated region
  $region50: #{convtranse2_forward.2} parent=0 // pred_check
    _
  $region51: #{convtranse2_forward.2} parent=0 // pred_check_branch
    %1386 = sbr.rel (0) target = $region53
  $region52: #{convtranse2_forward.2} parent=0 // pred_region
    _
  $region53: #{convtranse2_forward.2} parent=0 // pred_fallthru
    _

</llo_original>
